<compile_context>
chip_gen: v7x
topology: tpu7x:2x2x1
jax: 0.10.0
libtpu: 0.0.40
codegen_flags: <defaults>
</compile_context>

<pallas_src>
import jax
import jax.numpy as jnp
import numpy as np
from jax.experimental import pallas as pl
from jax.experimental.pallas import tpu as pltpu


# ----------------------------------------------------------------------------
# Fused kernel factory (shapes baked in at trace time).
# ----------------------------------------------------------------------------
def _make_fused_kernel(T, Bp, B, I, H, num_layers):
    H2, H4, H8, H16 = 2 * H, 4 * H, 8 * H, 16 * H

    def kernel(*refs):
        # refs = [x] + [w_all, whh_blk, bias] * num_layers
        #        + [fc_w, fc_b, act_mul, act_add] + [out]
        #        + [seqf_scr, seqb_scr, g_scr]
        x_ref = refs[0]
        k = 1
        layer_refs = []
        for _ in range(num_layers):
            layer_refs.append((refs[k], refs[k + 1], refs[k + 2]))
            k += 3
        fcw_ref, fcb_ref = refs[k], refs[k + 1]
        amul_ref, aadd_ref = refs[k + 2], refs[k + 3]
        out_ref = refs[k + 4]
        seqf_scr, seqb_scr, g_scr = refs[k + 5], refs[k + 6], refs[k + 7]

        act_mul = amul_ref[...]                      # (1, 8H) f32
        act_add = aadd_ref[...]                      # (1, 8H) f32

        S = x_ref[...]                               # (T*Bp, in) bf16
        h_f_last = None
        h_b_first = None

        for layer in range(num_layers):
            w_all_ref, whh_ref, bias_ref = layer_refs[layer]
            last = layer == num_layers - 1
            w_all = w_all_ref[...]                   # (in, 16H) bf16
            whh = whh_ref[...]                       # (2H, 8H)  bf16, block-diag
            bias = bias_ref[...]                     # (1, 8H)   f32 (both dirs)

            # --- Hoisted input projection (off the serial path) -------------
            if not last:
                # ONE wide dot covering both directions; fwd gates land in
                # lanes [:8H], bwd gates in [8H:].
                gall = jnp.dot(S, w_all, preferred_element_type=jnp.float32)
                g_scr[:, :H8] = gall[:, :H8] + bias
                g_scr[:, H8:] = gall[:, H8:]
                gb_last = None
            else:
                # Only lstm_out[:, -1, :] is consumed downstream: project the
                # backward direction for just the single timestep it needs.
                gfwd = jnp.dot(S, w_all[:, :H8],
                               preferred_element_type=jnp.float32) + bias
                g_scr[:, :H8] = gfwd
                if layer == 0:
                    s_last = S[(T - 1) * Bp:, :]
                else:
                    s_last = jnp.concatenate(
                        [seqf_scr[(T - 1) * Bp:, :], seqb_scr[(T - 1) * Bp:, :]],
                        axis=1).astype(jnp.bfloat16)
                gb_last = jnp.dot(s_last, w_all[:, H8:],
                                  preferred_element_type=jnp.float32)

            # --- Fused fwd+bwd recurrence ------------------------------------
            # Step s: fwd direction consumes time s, bwd consumes time T-1-s.
            h = jnp.zeros((Bp, H2), jnp.float32)     # [h_f | h_b]
            c = jnp.zeros((Bp, H2), jnp.float32)     # [c_f | c_b]
            for s in range(T):                        # static unroll (T small)
                g = g_scr[s * Bp:(s + 1) * Bp, :H8] + jnp.dot(
                    h.astype(jnp.bfloat16), whh,
                    preferred_element_type=jnp.float32)
                if last:
                    if s == 0:
                        g = g + gb_last
                    # s > 0: bwd lanes carry bounded, never-read values; the
                    # block-diagonal whh keeps the fwd lanes exact.
                else:
                    g = g + g_scr[(T - 1 - s) * Bp:(T - s) * Bp, H8:]
                # One full-width tanh; sigmoid lanes were pre-scaled by 0.5 in
                # the packed weights, so act = 0.5*tanh + 0.5 == sigmoid there.
                th = jnp.tanh(g)
                a = th * act_mul + act_add
                i_g = a[:, 0:H2]                      # [i_f | i_b]
                f_g = a[:, H2:H4]                     # [f_f | f_b]
                g_g = a[:, H4:H4 + H2]                # [g_f | g_b]
                o_g = a[:, H4 + H2:H8]                # [o_f | o_b]
                c = f_g * c + i_g * g_g
                h = o_g * jnp.tanh(c)
                if last:
                    if s == 0:
                        h_b_first = h[:, H:]          # bwd hidden at t = T-1
                else:
                    seqf_scr[s * Bp:(s + 1) * Bp, :] = h[:, :H]
                    seqb_scr[(T - 1 - s) * Bp:(T - s) * Bp, :] = h[:, H:]

            if not last:
                # Next layer's input: [h_f(t) | h_b(t)] per time row.
                S = jnp.concatenate([seqf_scr[...], seqb_scr[...]],
                                    axis=1).astype(jnp.bfloat16)
            else:
                h_f_last = h[:, :H]                   # fwd hidden at t = T-1

        # Dropout (eval) == identity; fused Linear head (tiny, f32).
        fcw = fcw_ref[...]                            # (2H, O)
        y = (jnp.dot(h_f_last, fcw[:H, :], preferred_element_type=jnp.float32)
             + jnp.dot(h_b_first, fcw[H:, :], preferred_element_type=jnp.float32)
             + fcb_ref[...])
        out_ref[...] = y[:B, :].astype(out_ref.dtype)

    return kernel


# ----------------------------------------------------------------------------
# Wrapper: one pallas_call for the whole model.
# ----------------------------------------------------------------------------
@jax.jit
def bidirectional_lstm_forward(x_btf, packed):
    """x_btf: (B, T, input_size), batch_first like the PyTorch module."""
    B, T, I = x_btf.shape
    H = packed["fc_w_t"].shape[0] // 2
    O = packed["fc_w_t"].shape[1]
    num_layers = len(packed["layers"])
    Bp = ((B + 7) // 8) * 8                           # sublane-aligned batch

    # Time-major, batch padded to Bp, flattened to rows ordered (t * Bp + b),
    # cast to bf16 (single-pass MXU operands).
    x_tm = jnp.transpose(x_btf.astype(jnp.float32), (1, 0, 2))
    x_tm = jnp.pad(x_tm, ((0, 0), (0, Bp - B), (0, 0)))
    x_flat = x_tm.reshape(T * Bp, I).astype(jnp.bfloat16)

    inputs = [x_flat]
    in_specs = [pl.BlockSpec((T * Bp, I), lambda: (0, 0))]
    for layer in range(num_layers):
        p = packed["layers"][layer]
        in_sz = I if layer == 0 else 2 * H
        inputs += [p["w_all"], p["whh_blk"], p["bias"]]
        in_specs += [
            pl.BlockSpec((in_sz, 16 * H), lambda: (0, 0)),
            pl.BlockSpec((2 * H, 8 * H), lambda: (0, 0)),
            pl.BlockSpec((1, 8 * H), lambda: (0, 0)),
        ]
    inputs += [packed["fc_w_t"], packed["fc_b"],
               packed["act_mul"], packed["act_add"]]
    in_specs += [pl.BlockSpec((2 * H, O), lambda: (0, 0)),
                 pl.BlockSpec((1, O), lambda: (0, 0)),
                 pl.BlockSpec((1, 8 * H), lambda: (0, 0)),
                 pl.BlockSpec((1, 8 * H), lambda: (0, 0))]

    kernel = _make_fused_kernel(T, Bp, B, I, H, num_layers)
    return pl.pallas_call(
        kernel,
        out_shape=jax.ShapeDtypeStruct((B, O), jnp.float32),
        in_specs=in_specs,
        out_specs=pl.BlockSpec((B, O), lambda: (0, 0)),
        scratch_shapes=[
            pltpu.VMEM((T * Bp, H), jnp.float32),        # prev-layer fwd h seq
            pltpu.VMEM((T * Bp, H), jnp.float32),        # prev-layer bwd h seq
            pltpu.VMEM((T * Bp, 16 * H), jnp.float32),   # hoisted gate proj.
        ],
    )(*inputs)


# ----------------------------------------------------------------------------
# Parameter construction (deterministic, mimics PyTorch LSTM/Linear shapes).
# ----------------------------------------------------------------------------
def init_params(key, input_size, hidden, num_layers, output_size):
    params = {"layers": []}
    scale = 1.0 / np.sqrt(hidden)
    for layer in range(num_layers):
        in_sz = input_size if layer == 0 else 2 * hidden
        dirs = []
        for _ in range(2):                               # forward, backward
            key, k1, k2, k3, k4 = jax.random.split(key, 5)
            w_ih = jax.random.normal(k1, (4 * hidden, in_sz), jnp.float32) * scale
            w_hh = jax.random.normal(k2, (4 * hidden, hidden), jnp.float32) * scale
            b_ih = jax.random.normal(k3, (4 * hidden,), jnp.float32) * scale
            b_hh = jax.random.normal(k4, (4 * hidden,), jnp.float32) * scale
            dirs.append({
                "w_ih_t": w_ih.T,                        # (in, 4H) cols [i f g o]
                "w_hh_t": w_hh.T,                        # (H, 4H)
                "bias": b_ih + b_hh,                     # (4H,)
            })
        params["layers"].append(dirs)
    key, k1, k2 = jax.random.split(key, 3)
    w_fc = jax.random.normal(k1, (output_size, 2 * hidden), jnp.float32) * scale
    b_fc = jax.random.normal(k2, (output_size,), jnp.float32) * scale
    params["fc_w_t"] = w_fc.T                            # (2H, O)
    params["fc_b"] = b_fc[None, :]                       # (1, O)
    return params


def pack_params(raw, hidden):
    """Pack per-direction LSTM weights for the fused kernel.

    Fused gate-lane layout (8H wide): gate k in (i,f,g,o) of direction d lives
    at lanes [k*2H + d*H, k*2H + (d+1)*H).  The 0.5 pre-scale from
    sigmoid(x) = 0.5*(1 + tanh(x/2)) is folded into every weight/bias feeding
    the i/f/o lanes.  w_all concatenates the fwd (lanes [:8H]) and bwd
    (lanes [8H:]) input projections; whh_blk is block-diagonal over [h_f|h_b].
    """
    H = hidden
    packed = {"layers": []}
    for dirs in raw["layers"]:
        in_sz = dirs[0]["w_ih_t"].shape[0]
        w_all = np.zeros((in_sz, 16 * H), np.float32)
        whh_blk = np.zeros((2 * H, 8 * H), np.float32)
        bias = np.zeros((8 * H,), np.float32)
        for d in range(2):                               # 0 = fwd, 1 = bwd
            w_ih_t = np.asarray(dirs[d]["w_ih_t"], np.float32)
            w_hh_t = np.asarray(dirs[d]["w_hh_t"], np.float32)
            b = np.asarray(dirs[d]["bias"], np.float32)
            for k in range(4):                           # i, f, g, o
                s = 1.0 if k == 2 else 0.5
                lo, hi = k * 2 * H + d * H, k * 2 * H + (d + 1) * H
                w_all[:, d * 8 * H + lo:d * 8 * H + hi] = \
                    w_ih_t[:, k * H:(k + 1) * H] * s
                whh_blk[d * H:(d + 1) * H, lo:hi] = \
                    w_hh_t[:, k * H:(k + 1) * H] * s
                bias[lo:hi] = b[k * H:(k + 1) * H] * s
        packed["layers"].append({
            "w_all": jnp.asarray(w_all, jnp.bfloat16),
            "whh_blk": jnp.asarray(whh_blk, jnp.bfloat16),
            "bias": jnp.asarray(bias[None, :], jnp.float32),
        })
    packed["fc_w_t"] = jnp.asarray(raw["fc_w_t"], jnp.float32)
    packed["fc_b"] = jnp.asarray(raw["fc_b"], jnp.float32)
    # Per-lane affine applied after the full-width tanh:
    #   i/f/o lanes -> 0.5*t + 0.5 (== sigmoid), g lanes -> t (== tanh).
    a = np.full((1, 8 * H), 0.5, np.float32)
    b_ = np.full((1, 8 * H), 0.5, np.float32)
    a[:, 4 * H:6 * H] = 1.0
    b_[:, 4 * H:6 * H] = 0.0
    packed["act_mul"] = jnp.asarray(a)
    packed["act_add"] = jnp.asarray(b_)
    return packed


# ----------------------------------------------------------------------------
# numpy float64 reference of the PyTorch module's eval-mode forward.
# ----------------------------------------------------------------------------
def _sigmoid(x):
    return 1.0 / (1.0 + np.exp(-x))


def _reference_forward(x, raw, hidden):
    x = np.asarray(x, np.float64)
    B, T, _ = x.shape
    H = hidden
    seq = x
    for dirs in raw["layers"]:
        outs = []
        for d in range(2):
            w_ih_t = np.asarray(dirs[d]["w_ih_t"], np.float64)
            w_hh_t = np.asarray(dirs[d]["w_hh_t"], np.float64)
            bias = np.asarray(dirs[d]["bias"], np.float64)
            h = np.zeros((B, H)); c = np.zeros((B, H))
            hs = np.zeros((B, T, H))
            order = range(T - 1, -1, -1) if d == 1 else range(T)
            for t in order:
                g = seq[:, t, :] @ w_ih_t + h @ w_hh_t + bias
                i = _sigmoid(g[:, :H]); f = _sigmoid(g[:, H:2 * H])
                gg = np.tanh(g[:, 2 * H:3 * H]); o = _sigmoid(g[:, 3 * H:])
                c = f * c + i * gg
                h = o * np.tanh(c)
                hs[:, t, :] = h
            outs.append(hs)
        seq = np.concatenate(outs, axis=-1)
    last = seq[:, -1, :]
    w_fc_t = np.asarray(raw["fc_w_t"], np.float64)
    b_fc = np.asarray(raw["fc_b"], np.float64)[0]
    return last @ w_fc_t + b_fc


if __name__ == "__main__":
    batch, seq_len = 4, 8
    input_size, hidden, num_layers, output_size = 8, 32, 2, 4

    key = jax.random.PRNGKey(0)
    key, kx = jax.random.split(key)
    x = jax.random.normal(kx, (batch, seq_len, input_size), jnp.float32)
    raw = init_params(key, input_size, hidden, num_layers, output_size)
    packed = pack_params(raw, hidden)

    y = bidirectional_lstm_forward(x, packed)
    y = jax.block_until_ready(y)
    assert y.shape == (batch, output_size), y.shape

    # Correctness check against a float64 host reference.  Tolerance is set
    # for bf16 MXU operands (weights / inputs / recurrent h are bf16 on the
    # MXU; all accumulation and gate math stays f32).
    y_ref = _reference_forward(np.asarray(x), raw, hidden)
    err = float(np.max(np.abs(np.asarray(y, np.float64) - y_ref)))
    assert err < 6e-2, f"max abs error vs reference: {err}"
    print("KERNEL_OK")
</pallas_src>

<mosaic_0001>
module attributes {stable_mosaic.version = 11 : i64} {
  func.func @kernel(%arg0: memref<64x8xbf16, #tpu.memory_space<vmem>>, %arg1: memref<8x512xbf16, #tpu.memory_space<vmem>>, %arg2: memref<64x256xbf16, #tpu.memory_space<vmem>>, %arg3: memref<1x256xf32, #tpu.memory_space<vmem>>, %arg4: memref<64x512xbf16, #tpu.memory_space<vmem>>, %arg5: memref<64x256xbf16, #tpu.memory_space<vmem>>, %arg6: memref<1x256xf32, #tpu.memory_space<vmem>>, %arg7: memref<64x4xf32, #tpu.memory_space<vmem>>, %arg8: memref<1x4xf32, #tpu.memory_space<vmem>>, %arg9: memref<1x256xf32, #tpu.memory_space<vmem>>, %arg10: memref<1x256xf32, #tpu.memory_space<vmem>>, %arg11: memref<4x4xf32, #tpu.memory_space<vmem>>, %arg12: memref<64x32xf32, #tpu.memory_space<vmem>>, %arg13: memref<64x32xf32, #tpu.memory_space<vmem>>, %arg14: memref<64x512xf32, #tpu.memory_space<vmem>>) attributes {dimension_semantics = [], scalar_prefetch = 0 : i64, scratch_operands = 3 : i64, tpu.core_type = #tpu.core_type<tc>} {
    %c0 = arith.constant 0 : index
    %c0_0 = arith.constant 0 : index
    %0 = vector.load %arg9[%c0, %c0_0] : memref<1x256xf32, #tpu.memory_space<vmem>>, vector<1x256xf32>
    %c0_1 = arith.constant 0 : index
    %c0_2 = arith.constant 0 : index
    %1 = vector.load %arg10[%c0_1, %c0_2] : memref<1x256xf32, #tpu.memory_space<vmem>>, vector<1x256xf32>
    %c0_3 = arith.constant 0 : index
    %c0_4 = arith.constant 0 : index
    %2 = vector.load %arg0[%c0_3, %c0_4] : memref<64x8xbf16, #tpu.memory_space<vmem>>, vector<64x8xbf16>
    %c0_5 = arith.constant 0 : index
    %c0_6 = arith.constant 0 : index
    %3 = vector.load %arg1[%c0_5, %c0_6] : memref<8x512xbf16, #tpu.memory_space<vmem>>, vector<8x512xbf16>
    %c0_7 = arith.constant 0 : index
    %c0_8 = arith.constant 0 : index
    %4 = vector.load %arg2[%c0_7, %c0_8] : memref<64x256xbf16, #tpu.memory_space<vmem>>, vector<64x256xbf16>
    %c0_9 = arith.constant 0 : index
    %c0_10 = arith.constant 0 : index
    %5 = vector.load %arg3[%c0_9, %c0_10] : memref<1x256xf32, #tpu.memory_space<vmem>>, vector<1x256xf32>
    %cst = arith.constant dense<0.000000e+00> : vector<64x512xf32>
    %6 = tpu.matmul %2, %3, %cst {dimension_numbers = #tpu.dot_dimension_numbers<[1], [0], [0], [1], [0, 0, 1, 1], [], []>} : vector<64x8xbf16>, vector<8x512xbf16>, vector<64x512xf32> -> vector<64x512xf32>
    %7 = vector.extract_strided_slice %6 {offsets = [0, 0], sizes = [64, 256], strides = [1, 1]} : vector<64x512xf32> to vector<64x256xf32>
    %8 = vector.broadcast %5 : vector<1x256xf32> to vector<64x256xf32>
    %9 = arith.addf %7, %8 : vector<64x256xf32>
    %c0_11 = arith.constant 0 : index
    %c0_12 = arith.constant 0 : index
    %10 = vector.load %arg14[%c0_11, %c0_12] : memref<64x512xf32, #tpu.memory_space<vmem>>, vector<64x256xf32>
    tpu.vector_store %arg14[%c0_11, %c0_12], %9 {strides = array<i32>} : memref<64x512xf32, #tpu.memory_space<vmem>>, vector<64x256xf32>,
    %11 = vector.extract_strided_slice %6 {offsets = [0, 256], sizes = [64, 256], strides = [1, 1]} : vector<64x512xf32> to vector<64x256xf32>
    %c0_13 = arith.constant 0 : index
    %c256 = arith.constant 256 : index
    %12 = vector.load %arg14[%c0_13, %c256] : memref<64x512xf32, #tpu.memory_space<vmem>>, vector<64x256xf32>
    tpu.vector_store %arg14[%c0_13, %c256], %11 {strides = array<i32>} : memref<64x512xf32, #tpu.memory_space<vmem>>, vector<64x256xf32>,
    %cst_14 = arith.constant 0.000000e+00 : f32
    %13 = vector.broadcast %cst_14 : f32 to vector<8x64xf32>
    %cst_15 = arith.constant 0.000000e+00 : f32
    %14 = vector.broadcast %cst_15 : f32 to vector<8x64xf32>
    %c0_16 = arith.constant 0 : index
    %c0_17 = arith.constant 0 : index
    %15 = vector.load %arg14[%c0_16, %c0_17] : memref<64x512xf32, #tpu.memory_space<vmem>>, vector<8x256xf32>
    %16 = arith.truncf %13 : vector<8x64xf32> to vector<8x64xbf16>
    %cst_18 = arith.constant dense<0.000000e+00> : vector<8x256xf32>
    %17 = tpu.matmul %16, %4, %cst_18 {dimension_numbers = #tpu.dot_dimension_numbers<[1], [0], [0], [1], [0, 0, 1, 1], [], []>} : vector<8x64xbf16>, vector<64x256xbf16>, vector<8x256xf32> -> vector<8x256xf32>
    %18 = arith.addf %15, %17 : vector<8x256xf32>
    %c56 = arith.constant 56 : index
    %c256_19 = arith.constant 256 : index
    %19 = vector.load %arg14[%c56, %c256_19] : memref<64x512xf32, #tpu.memory_space<vmem>>, vector<8x256xf32>
    %20 = arith.addf %18, %19 : vector<8x256xf32>
    %21 = math.tanh %20 : vector<8x256xf32>
    %22 = vector.broadcast %0 : vector<1x256xf32> to vector<8x256xf32>
    %23 = arith.mulf %21, %22 : vector<8x256xf32>
    %24 = vector.broadcast %1 : vector<1x256xf32> to vector<8x256xf32>
    %25 = arith.addf %23, %24 : vector<8x256xf32>
    %26 = vector.extract_strided_slice %25 {offsets = [0, 0], sizes = [8, 64], strides = [1, 1]} : vector<8x256xf32> to vector<8x64xf32>
    %27 = vector.extract_strided_slice %25 {offsets = [0, 64], sizes = [8, 64], strides = [1, 1]} : vector<8x256xf32> to vector<8x64xf32>
    %28 = vector.extract_strided_slice %25 {offsets = [0, 128], sizes = [8, 64], strides = [1, 1]} : vector<8x256xf32> to vector<8x64xf32>
    %29 = vector.extract_strided_slice %25 {offsets = [0, 192], sizes = [8, 64], strides = [1, 1]} : vector<8x256xf32> to vector<8x64xf32>
    %30 = arith.mulf %27, %14 : vector<8x64xf32>
    %31 = arith.mulf %26, %28 : vector<8x64xf32>
    %32 = arith.addf %30, %31 : vector<8x64xf32>
    %33 = math.tanh %32 : vector<8x64xf32>
    %34 = arith.mulf %29, %33 : vector<8x64xf32>
    %35 = vector.extract_strided_slice %34 {offsets = [0, 0], sizes = [8, 32], strides = [1, 1]} : vector<8x64xf32> to vector<8x32xf32>
    %c0_20 = arith.constant 0 : index
    %c0_21 = arith.constant 0 : index
    %36 = vector.load %arg12[%c0_20, %c0_21] : memref<64x32xf32, #tpu.memory_space<vmem>>, vector<8x32xf32>
    tpu.vector_store %arg12[%c0_20, %c0_21], %35 {strides = array<i32>} : memref<64x32xf32, #tpu.memory_space<vmem>>, vector<8x32xf32>,
    %37 = vector.extract_strided_slice %34 {offsets = [0, 32], sizes = [8, 32], strides = [1, 1]} : vector<8x64xf32> to vector<8x32xf32>
    %c56_22 = arith.constant 56 : index
    %c0_23 = arith.constant 0 : index
    %38 = vector.load %arg13[%c56_22, %c0_23] : memref<64x32xf32, #tpu.memory_space<vmem>>, vector<8x32xf32>
    tpu.vector_store %arg13[%c56_22, %c0_23], %37 {strides = array<i32>} : memref<64x32xf32, #tpu.memory_space<vmem>>, vector<8x32xf32>,
    %c8 = arith.constant 8 : index
    %c0_24 = arith.constant 0 : index
    %39 = vector.load %arg14[%c8, %c0_24] : memref<64x512xf32, #tpu.memory_space<vmem>>, vector<8x256xf32>
    %40 = arith.truncf %34 : vector<8x64xf32> to vector<8x64xbf16>
    %cst_25 = arith.constant dense<0.000000e+00> : vector<8x256xf32>
    %41 = tpu.matmul %40, %4, %cst_25 {dimension_numbers = #tpu.dot_dimension_numbers<[1], [0], [0], [1], [0, 0, 1, 1], [], []>} : vector<8x64xbf16>, vector<64x256xbf16>, vector<8x256xf32> -> vector<8x256xf32>
    %42 = arith.addf %39, %41 : vector<8x256xf32>
    %c48 = arith.constant 48 : index
    %c256_26 = arith.constant 256 : index
    %43 = vector.load %arg14[%c48, %c256_26] : memref<64x512xf32, #tpu.memory_space<vmem>>, vector<8x256xf32>
    %44 = arith.addf %42, %43 : vector<8x256xf32>
    %45 = math.tanh %44 : vector<8x256xf32>
    %46 = vector.broadcast %0 : vector<1x256xf32> to vector<8x256xf32>
    %47 = arith.mulf %45, %46 : vector<8x256xf32>
    %48 = vector.broadcast %1 : vector<1x256xf32> to vector<8x256xf32>
    %49 = arith.addf %47, %48 : vector<8x256xf32>
    %50 = vector.extract_strided_slice %49 {offsets = [0, 0], sizes = [8, 64], strides = [1, 1]} : vector<8x256xf32> to vector<8x64xf32>
    %51 = vector.extract_strided_slice %49 {offsets = [0, 64], sizes = [8, 64], strides = [1, 1]} : vector<8x256xf32> to vector<8x64xf32>
    %52 = vector.extract_strided_slice %49 {offsets = [0, 128], sizes = [8, 64], strides = [1, 1]} : vector<8x256xf32> to vector<8x64xf32>
    %53 = vector.extract_strided_slice %49 {offsets = [0, 192], sizes = [8, 64], strides = [1, 1]} : vector<8x256xf32> to vector<8x64xf32>
    %54 = arith.mulf %51, %32 : vector<8x64xf32>
    %55 = arith.mulf %50, %52 : vector<8x64xf32>
    %56 = arith.addf %54, %55 : vector<8x64xf32>
    %57 = math.tanh %56 : vector<8x64xf32>
    %58 = arith.mulf %53, %57 : vector<8x64xf32>
    %59 = vector.extract_strided_slice %58 {offsets = [0, 0], sizes = [8, 32], strides = [1, 1]} : vector<8x64xf32> to vector<8x32xf32>
    %c8_27 = arith.constant 8 : index
    %c0_28 = arith.constant 0 : index
    %60 = vector.load %arg12[%c8_27, %c0_28] : memref<64x32xf32, #tpu.memory_space<vmem>>, vector<8x32xf32>
    tpu.vector_store %arg12[%c8_27, %c0_28], %59 {strides = array<i32>} : memref<64x32xf32, #tpu.memory_space<vmem>>, vector<8x32xf32>,
    %61 = vector.extract_strided_slice %58 {offsets = [0, 32], sizes = [8, 32], strides = [1, 1]} : vector<8x64xf32> to vector<8x32xf32>
    %c48_29 = arith.constant 48 : index
    %c0_30 = arith.constant 0 : index
    %62 = vector.load %arg13[%c48_29, %c0_30] : memref<64x32xf32, #tpu.memory_space<vmem>>, vector<8x32xf32>
    tpu.vector_store %arg13[%c48_29, %c0_30], %61 {strides = array<i32>} : memref<64x32xf32, #tpu.memory_space<vmem>>, vector<8x32xf32>,
    %c16 = arith.constant 16 : index
    %c0_31 = arith.constant 0 : index
    %63 = vector.load %arg14[%c16, %c0_31] : memref<64x512xf32, #tpu.memory_space<vmem>>, vector<8x256xf32>
    %64 = arith.truncf %58 : vector<8x64xf32> to vector<8x64xbf16>
    %cst_32 = arith.constant dense<0.000000e+00> : vector<8x256xf32>
    %65 = tpu.matmul %64, %4, %cst_32 {dimension_numbers = #tpu.dot_dimension_numbers<[1], [0], [0], [1], [0, 0, 1, 1], [], []>} : vector<8x64xbf16>, vector<64x256xbf16>, vector<8x256xf32> -> vector<8x256xf32>
    %66 = arith.addf %63, %65 : vector<8x256xf32>
    %c40 = arith.constant 40 : index
    %c256_33 = arith.constant 256 : index
    %67 = vector.load %arg14[%c40, %c256_33] : memref<64x512xf32, #tpu.memory_space<vmem>>, vector<8x256xf32>
    %68 = arith.addf %66, %67 : vector<8x256xf32>
    %69 = math.tanh %68 : vector<8x256xf32>
    %70 = vector.broadcast %0 : vector<1x256xf32> to vector<8x256xf32>
    %71 = arith.mulf %69, %70 : vector<8x256xf32>
    %72 = vector.broadcast %1 : vector<1x256xf32> to vector<8x256xf32>
    %73 = arith.addf %71, %72 : vector<8x256xf32>
    %74 = vector.extract_strided_slice %73 {offsets = [0, 0], sizes = [8, 64], strides = [1, 1]} : vector<8x256xf32> to vector<8x64xf32>
    %75 = vector.extract_strided_slice %73 {offsets = [0, 64], sizes = [8, 64], strides = [1, 1]} : vector<8x256xf32> to vector<8x64xf32>
    %76 = vector.extract_strided_slice %73 {offsets = [0, 128], sizes = [8, 64], strides = [1, 1]} : vector<8x256xf32> to vector<8x64xf32>
    %77 = vector.extract_strided_slice %73 {offsets = [0, 192], sizes = [8, 64], strides = [1, 1]} : vector<8x256xf32> to vector<8x64xf32>
    %78 = arith.mulf %75, %56 : vector<8x64xf32>
    %79 = arith.mulf %74, %76 : vector<8x64xf32>
    %80 = arith.addf %78, %79 : vector<8x64xf32>
    %81 = math.tanh %80 : vector<8x64xf32>
    %82 = arith.mulf %77, %81 : vector<8x64xf32>
    %83 = vector.extract_strided_slice %82 {offsets = [0, 0], sizes = [8, 32], strides = [1, 1]} : vector<8x64xf32> to vector<8x32xf32>
    %c16_34 = arith.constant 16 : index
    %c0_35 = arith.constant 0 : index
    %84 = vector.load %arg12[%c16_34, %c0_35] : memref<64x32xf32, #tpu.memory_space<vmem>>, vector<8x32xf32>
    tpu.vector_store %arg12[%c16_34, %c0_35], %83 {strides = array<i32>} : memref<64x32xf32, #tpu.memory_space<vmem>>, vector<8x32xf32>,
    %85 = vector.extract_strided_slice %82 {offsets = [0, 32], sizes = [8, 32], strides = [1, 1]} : vector<8x64xf32> to vector<8x32xf32>
    %c40_36 = arith.constant 40 : index
    %c0_37 = arith.constant 0 : index
    %86 = vector.load %arg13[%c40_36, %c0_37] : memref<64x32xf32, #tpu.memory_space<vmem>>, vector<8x32xf32>
    tpu.vector_store %arg13[%c40_36, %c0_37], %85 {strides = array<i32>} : memref<64x32xf32, #tpu.memory_space<vmem>>, vector<8x32xf32>,
    %c24 = arith.constant 24 : index
    %c0_38 = arith.constant 0 : index
    %87 = vector.load %arg14[%c24, %c0_38] : memref<64x512xf32, #tpu.memory_space<vmem>>, vector<8x256xf32>
    %88 = arith.truncf %82 : vector<8x64xf32> to vector<8x64xbf16>
    %cst_39 = arith.constant dense<0.000000e+00> : vector<8x256xf32>
    %89 = tpu.matmul %88, %4, %cst_39 {dimension_numbers = #tpu.dot_dimension_numbers<[1], [0], [0], [1], [0, 0, 1, 1], [], []>} : vector<8x64xbf16>, vector<64x256xbf16>, vector<8x256xf32> -> vector<8x256xf32>
    %90 = arith.addf %87, %89 : vector<8x256xf32>
    %c32 = arith.constant 32 : index
    %c256_40 = arith.constant 256 : index
    %91 = vector.load %arg14[%c32, %c256_40] : memref<64x512xf32, #tpu.memory_space<vmem>>, vector<8x256xf32>
    %92 = arith.addf %90, %91 : vector<8x256xf32>
    %93 = math.tanh %92 : vector<8x256xf32>
    %94 = vector.broadcast %0 : vector<1x256xf32> to vector<8x256xf32>
    %95 = arith.mulf %93, %94 : vector<8x256xf32>
    %96 = vector.broadcast %1 : vector<1x256xf32> to vector<8x256xf32>
    %97 = arith.addf %95, %96 : vector<8x256xf32>
    %98 = vector.extract_strided_slice %97 {offsets = [0, 0], sizes = [8, 64], strides = [1, 1]} : vector<8x256xf32> to vector<8x64xf32>
    %99 = vector.extract_strided_slice %97 {offsets = [0, 64], sizes = [8, 64], strides = [1, 1]} : vector<8x256xf32> to vector<8x64xf32>
    %100 = vector.extract_strided_slice %97 {offsets = [0, 128], sizes = [8, 64], strides = [1, 1]} : vector<8x256xf32> to vector<8x64xf32>
    %101 = vector.extract_strided_slice %97 {offsets = [0, 192], sizes = [8, 64], strides = [1, 1]} : vector<8x256xf32> to vector<8x64xf32>
    %102 = arith.mulf %99, %80 : vector<8x64xf32>
    %103 = arith.mulf %98, %100 : vector<8x64xf32>
    %104 = arith.addf %102, %103 : vector<8x64xf32>
    %105 = math.tanh %104 : vector<8x64xf32>
    %106 = arith.mulf %101, %105 : vector<8x64xf32>
    %107 = vector.extract_strided_slice %106 {offsets = [0, 0], sizes = [8, 32], strides = [1, 1]} : vector<8x64xf32> to vector<8x32xf32>
    %c24_41 = arith.constant 24 : index
    %c0_42 = arith.constant 0 : index
    %108 = vector.load %arg12[%c24_41, %c0_42] : memref<64x32xf32, #tpu.memory_space<vmem>>, vector<8x32xf32>
    tpu.vector_store %arg12[%c24_41, %c0_42], %107 {strides = array<i32>} : memref<64x32xf32, #tpu.memory_space<vmem>>, vector<8x32xf32>,
    %109 = vector.extract_strided_slice %106 {offsets = [0, 32], sizes = [8, 32], strides = [1, 1]} : vector<8x64xf32> to vector<8x32xf32>
    %c32_43 = arith.constant 32 : index
    %c0_44 = arith.constant 0 : index
    %110 = vector.load %arg13[%c32_43, %c0_44] : memref<64x32xf32, #tpu.memory_space<vmem>>, vector<8x32xf32>
    tpu.vector_store %arg13[%c32_43, %c0_44], %109 {strides = array<i32>} : memref<64x32xf32, #tpu.memory_space<vmem>>, vector<8x32xf32>,
    %c32_45 = arith.constant 32 : index
    %c0_46 = arith.constant 0 : index
    %111 = vector.load %arg14[%c32_45, %c0_46] : memref<64x512xf32, #tpu.memory_space<vmem>>, vector<8x256xf32>
    %112 = arith.truncf %106 : vector<8x64xf32> to vector<8x64xbf16>
    %cst_47 = arith.constant dense<0.000000e+00> : vector<8x256xf32>
    %113 = tpu.matmul %112, %4, %cst_47 {dimension_numbers = #tpu.dot_dimension_numbers<[1], [0], [0], [1], [0, 0, 1, 1], [], []>} : vector<8x64xbf16>, vector<64x256xbf16>, vector<8x256xf32> -> vector<8x256xf32>
    %114 = arith.addf %111, %113 : vector<8x256xf32>
    %c24_48 = arith.constant 24 : index
    %c256_49 = arith.constant 256 : index
    %115 = vector.load %arg14[%c24_48, %c256_49] : memref<64x512xf32, #tpu.memory_space<vmem>>, vector<8x256xf32>
    %116 = arith.addf %114, %115 : vector<8x256xf32>
    %117 = math.tanh %116 : vector<8x256xf32>
    %118 = vector.broadcast %0 : vector<1x256xf32> to vector<8x256xf32>
    %119 = arith.mulf %117, %118 : vector<8x256xf32>
    %120 = vector.broadcast %1 : vector<1x256xf32> to vector<8x256xf32>
    %121 = arith.addf %119, %120 : vector<8x256xf32>
    %122 = vector.extract_strided_slice %121 {offsets = [0, 0], sizes = [8, 64], strides = [1, 1]} : vector<8x256xf32> to vector<8x64xf32>
    %123 = vector.extract_strided_slice %121 {offsets = [0, 64], sizes = [8, 64], strides = [1, 1]} : vector<8x256xf32> to vector<8x64xf32>
    %124 = vector.extract_strided_slice %121 {offsets = [0, 128], sizes = [8, 64], strides = [1, 1]} : vector<8x256xf32> to vector<8x64xf32>
    %125 = vector.extract_strided_slice %121 {offsets = [0, 192], sizes = [8, 64], strides = [1, 1]} : vector<8x256xf32> to vector<8x64xf32>
    %126 = arith.mulf %123, %104 : vector<8x64xf32>
    %127 = arith.mulf %122, %124 : vector<8x64xf32>
    %128 = arith.addf %126, %127 : vector<8x64xf32>
    %129 = math.tanh %128 : vector<8x64xf32>
    %130 = arith.mulf %125, %129 : vector<8x64xf32>
    %131 = vector.extract_strided_slice %130 {offsets = [0, 0], sizes = [8, 32], strides = [1, 1]} : vector<8x64xf32> to vector<8x32xf32>
    %c32_50 = arith.constant 32 : index
    %c0_51 = arith.constant 0 : index
    %132 = vector.load %arg12[%c32_50, %c0_51] : memref<64x32xf32, #tpu.memory_space<vmem>>, vector<8x32xf32>
    tpu.vector_store %arg12[%c32_50, %c0_51], %131 {strides = array<i32>} : memref<64x32xf32, #tpu.memory_space<vmem>>, vector<8x32xf32>,
    %133 = vector.extract_strided_slice %130 {offsets = [0, 32], sizes = [8, 32], strides = [1, 1]} : vector<8x64xf32> to vector<8x32xf32>
    %c24_52 = arith.constant 24 : index
    %c0_53 = arith.constant 0 : index
    %134 = vector.load %arg13[%c24_52, %c0_53] : memref<64x32xf32, #tpu.memory_space<vmem>>, vector<8x32xf32>
    tpu.vector_store %arg13[%c24_52, %c0_53], %133 {strides = array<i32>} : memref<64x32xf32, #tpu.memory_space<vmem>>, vector<8x32xf32>,
    %c40_54 = arith.constant 40 : index
    %c0_55 = arith.constant 0 : index
    %135 = vector.load %arg14[%c40_54, %c0_55] : memref<64x512xf32, #tpu.memory_space<vmem>>, vector<8x256xf32>
    %136 = arith.truncf %130 : vector<8x64xf32> to vector<8x64xbf16>
    %cst_56 = arith.constant dense<0.000000e+00> : vector<8x256xf32>
    %137 = tpu.matmul %136, %4, %cst_56 {dimension_numbers = #tpu.dot_dimension_numbers<[1], [0], [0], [1], [0, 0, 1, 1], [], []>} : vector<8x64xbf16>, vector<64x256xbf16>, vector<8x256xf32> -> vector<8x256xf32>
    %138 = arith.addf %135, %137 : vector<8x256xf32>
    %c16_57 = arith.constant 16 : index
    %c256_58 = arith.constant 256 : index
    %139 = vector.load %arg14[%c16_57, %c256_58] : memref<64x512xf32, #tpu.memory_space<vmem>>, vector<8x256xf32>
    %140 = arith.addf %138, %139 : vector<8x256xf32>
    %141 = math.tanh %140 : vector<8x256xf32>
    %142 = vector.broadcast %0 : vector<1x256xf32> to vector<8x256xf32>
    %143 = arith.mulf %141, %142 : vector<8x256xf32>
    %144 = vector.broadcast %1 : vector<1x256xf32> to vector<8x256xf32>
    %145 = arith.addf %143, %144 : vector<8x256xf32>
    %146 = vector.extract_strided_slice %145 {offsets = [0, 0], sizes = [8, 64], strides = [1, 1]} : vector<8x256xf32> to vector<8x64xf32>
    %147 = vector.extract_strided_slice %145 {offsets = [0, 64], sizes = [8, 64], strides = [1, 1]} : vector<8x256xf32> to vector<8x64xf32>
    %148 = vector.extract_strided_slice %145 {offsets = [0, 128], sizes = [8, 64], strides = [1, 1]} : vector<8x256xf32> to vector<8x64xf32>
    %149 = vector.extract_strided_slice %145 {offsets = [0, 192], sizes = [8, 64], strides = [1, 1]} : vector<8x256xf32> to vector<8x64xf32>
    %150 = arith.mulf %147, %128 : vector<8x64xf32>
    %151 = arith.mulf %146, %148 : vector<8x64xf32>
    %152 = arith.addf %150, %151 : vector<8x64xf32>
    %153 = math.tanh %152 : vector<8x64xf32>
    %154 = arith.mulf %149, %153 : vector<8x64xf32>
    %155 = vector.extract_strided_slice %154 {offsets = [0, 0], sizes = [8, 32], strides = [1, 1]} : vector<8x64xf32> to vector<8x32xf32>
    %c40_59 = arith.constant 40 : index
    %c0_60 = arith.constant 0 : index
    %156 = vector.load %arg12[%c40_59, %c0_60] : memref<64x32xf32, #tpu.memory_space<vmem>>, vector<8x32xf32>
    tpu.vector_store %arg12[%c40_59, %c0_60], %155 {strides = array<i32>} : memref<64x32xf32, #tpu.memory_space<vmem>>, vector<8x32xf32>,
    %157 = vector.extract_strided_slice %154 {offsets = [0, 32], sizes = [8, 32], strides = [1, 1]} : vector<8x64xf32> to vector<8x32xf32>
    %c16_61 = arith.constant 16 : index
    %c0_62 = arith.constant 0 : index
    %158 = vector.load %arg13[%c16_61, %c0_62] : memref<64x32xf32, #tpu.memory_space<vmem>>, vector<8x32xf32>
    tpu.vector_store %arg13[%c16_61, %c0_62], %157 {strides = array<i32>} : memref<64x32xf32, #tpu.memory_space<vmem>>, vector<8x32xf32>,
    %c48_63 = arith.constant 48 : index
    %c0_64 = arith.constant 0 : index
    %159 = vector.load %arg14[%c48_63, %c0_64] : memref<64x512xf32, #tpu.memory_space<vmem>>, vector<8x256xf32>
    %160 = arith.truncf %154 : vector<8x64xf32> to vector<8x64xbf16>
    %cst_65 = arith.constant dense<0.000000e+00> : vector<8x256xf32>
    %161 = tpu.matmul %160, %4, %cst_65 {dimension_numbers = #tpu.dot_dimension_numbers<[1], [0], [0], [1], [0, 0, 1, 1], [], []>} : vector<8x64xbf16>, vector<64x256xbf16>, vector<8x256xf32> -> vector<8x256xf32>
    %162 = arith.addf %159, %161 : vector<8x256xf32>
    %c8_66 = arith.constant 8 : index
    %c256_67 = arith.constant 256 : index
    %163 = vector.load %arg14[%c8_66, %c256_67] : memref<64x512xf32, #tpu.memory_space<vmem>>, vector<8x256xf32>
    %164 = arith.addf %162, %163 : vector<8x256xf32>
    %165 = math.tanh %164 : vector<8x256xf32>
    %166 = vector.broadcast %0 : vector<1x256xf32> to vector<8x256xf32>
    %167 = arith.mulf %165, %166 : vector<8x256xf32>
    %168 = vector.broadcast %1 : vector<1x256xf32> to vector<8x256xf32>
    %169 = arith.addf %167, %168 : vector<8x256xf32>
    %170 = vector.extract_strided_slice %169 {offsets = [0, 0], sizes = [8, 64], strides = [1, 1]} : vector<8x256xf32> to vector<8x64xf32>
    %171 = vector.extract_strided_slice %169 {offsets = [0, 64], sizes = [8, 64], strides = [1, 1]} : vector<8x256xf32> to vector<8x64xf32>
    %172 = vector.extract_strided_slice %169 {offsets = [0, 128], sizes = [8, 64], strides = [1, 1]} : vector<8x256xf32> to vector<8x64xf32>
    %173 = vector.extract_strided_slice %169 {offsets = [0, 192], sizes = [8, 64], strides = [1, 1]} : vector<8x256xf32> to vector<8x64xf32>
    %174 = arith.mulf %171, %152 : vector<8x64xf32>
    %175 = arith.mulf %170, %172 : vector<8x64xf32>
    %176 = arith.addf %174, %175 : vector<8x64xf32>
    %177 = math.tanh %176 : vector<8x64xf32>
    %178 = arith.mulf %173, %177 : vector<8x64xf32>
    %179 = vector.extract_strided_slice %178 {offsets = [0, 0], sizes = [8, 32], strides = [1, 1]} : vector<8x64xf32> to vector<8x32xf32>
    %c48_68 = arith.constant 48 : index
    %c0_69 = arith.constant 0 : index
    %180 = vector.load %arg12[%c48_68, %c0_69] : memref<64x32xf32, #tpu.memory_space<vmem>>, vector<8x32xf32>
    tpu.vector_store %arg12[%c48_68, %c0_69], %179 {strides = array<i32>} : memref<64x32xf32, #tpu.memory_space<vmem>>, vector<8x32xf32>,
    %181 = vector.extract_strided_slice %178 {offsets = [0, 32], sizes = [8, 32], strides = [1, 1]} : vector<8x64xf32> to vector<8x32xf32>
    %c8_70 = arith.constant 8 : index
    %c0_71 = arith.constant 0 : index
    %182 = vector.load %arg13[%c8_70, %c0_71] : memref<64x32xf32, #tpu.memory_space<vmem>>, vector<8x32xf32>
    tpu.vector_store %arg13[%c8_70, %c0_71], %181 {strides = array<i32>} : memref<64x32xf32, #tpu.memory_space<vmem>>, vector<8x32xf32>,
    %c56_72 = arith.constant 56 : index
    %c0_73 = arith.constant 0 : index
    %183 = vector.load %arg14[%c56_72, %c0_73] : memref<64x512xf32, #tpu.memory_space<vmem>>, vector<8x256xf32>
    %184 = arith.truncf %178 : vector<8x64xf32> to vector<8x64xbf16>
    %cst_74 = arith.constant dense<0.000000e+00> : vector<8x256xf32>
    %185 = tpu.matmul %184, %4, %cst_74 {dimension_numbers = #tpu.dot_dimension_numbers<[1], [0], [0], [1], [0, 0, 1, 1], [], []>} : vector<8x64xbf16>, vector<64x256xbf16>, vector<8x256xf32> -> vector<8x256xf32>
    %186 = arith.addf %183, %185 : vector<8x256xf32>
    %c0_75 = arith.constant 0 : index
    %c256_76 = arith.constant 256 : index
    %187 = vector.load %arg14[%c0_75, %c256_76] : memref<64x512xf32, #tpu.memory_space<vmem>>, vector<8x256xf32>
    %188 = arith.addf %186, %187 : vector<8x256xf32>
    %189 = math.tanh %188 : vector<8x256xf32>
    %190 = vector.broadcast %0 : vector<1x256xf32> to vector<8x256xf32>
    %191 = arith.mulf %189, %190 : vector<8x256xf32>
    %192 = vector.broadcast %1 : vector<1x256xf32> to vector<8x256xf32>
    %193 = arith.addf %191, %192 : vector<8x256xf32>
    %194 = vector.extract_strided_slice %193 {offsets = [0, 0], sizes = [8, 64], strides = [1, 1]} : vector<8x256xf32> to vector<8x64xf32>
    %195 = vector.extract_strided_slice %193 {offsets = [0, 64], sizes = [8, 64], strides = [1, 1]} : vector<8x256xf32> to vector<8x64xf32>
    %196 = vector.extract_strided_slice %193 {offsets = [0, 128], sizes = [8, 64], strides = [1, 1]} : vector<8x256xf32> to vector<8x64xf32>
    %197 = vector.extract_strided_slice %193 {offsets = [0, 192], sizes = [8, 64], strides = [1, 1]} : vector<8x256xf32> to vector<8x64xf32>
    %198 = arith.mulf %195, %176 : vector<8x64xf32>
    %199 = arith.mulf %194, %196 : vector<8x64xf32>
    %200 = arith.addf %198, %199 : vector<8x64xf32>
    %201 = math.tanh %200 : vector<8x64xf32>
    %202 = arith.mulf %197, %201 : vector<8x64xf32>
    %203 = vector.extract_strided_slice %202 {offsets = [0, 0], sizes = [8, 32], strides = [1, 1]} : vector<8x64xf32> to vector<8x32xf32>
    %c56_77 = arith.constant 56 : index
    %c0_78 = arith.constant 0 : index
    %204 = vector.load %arg12[%c56_77, %c0_78] : memref<64x32xf32, #tpu.memory_space<vmem>>, vector<8x32xf32>
    tpu.vector_store %arg12[%c56_77, %c0_78], %203 {strides = array<i32>} : memref<64x32xf32, #tpu.memory_space<vmem>>, vector<8x32xf32>,
    %205 = vector.extract_strided_slice %202 {offsets = [0, 32], sizes = [8, 32], strides = [1, 1]} : vector<8x64xf32> to vector<8x32xf32>
    %c0_79 = arith.constant 0 : index
    %c0_80 = arith.constant 0 : index
    %206 = vector.load %arg13[%c0_79, %c0_80] : memref<64x32xf32, #tpu.memory_space<vmem>>, vector<8x32xf32>
    tpu.vector_store %arg13[%c0_79, %c0_80], %205 {strides = array<i32>} : memref<64x32xf32, #tpu.memory_space<vmem>>, vector<8x32xf32>,
    %c0_81 = arith.constant 0 : index
    %c0_82 = arith.constant 0 : index
    %207 = vector.load %arg12[%c0_81, %c0_82] : memref<64x32xf32, #tpu.memory_space<vmem>>, vector<64x32xf32>
    %c0_83 = arith.constant 0 : index
    %c0_84 = arith.constant 0 : index
    %208 = vector.load %arg13[%c0_83, %c0_84] : memref<64x32xf32, #tpu.memory_space<vmem>>, vector<64x32xf32>
    %209 = tpu.concatenate %207, %208 in 1 : vector<64x32xf32>, vector<64x32xf32> -> vector<64x64xf32>
    %210 = arith.truncf %209 : vector<64x64xf32> to vector<64x64xbf16>
    %c0_85 = arith.constant 0 : index
    %c0_86 = arith.constant 0 : index
    %211 = vector.load %arg4[%c0_85, %c0_86] : memref<64x512xbf16, #tpu.memory_space<vmem>>, vector<64x512xbf16>
    %c0_87 = arith.constant 0 : index
    %c0_88 = arith.constant 0 : index
    %212 = vector.load %arg5[%c0_87, %c0_88] : memref<64x256xbf16, #tpu.memory_space<vmem>>, vector<64x256xbf16>
    %c0_89 = arith.constant 0 : index
    %c0_90 = arith.constant 0 : index
    %213 = vector.load %arg6[%c0_89, %c0_90] : memref<1x256xf32, #tpu.memory_space<vmem>>, vector<1x256xf32>
    %214 = vector.extract_strided_slice %211 {offsets = [0, 0], sizes = [64, 256], strides = [1, 1]} : vector<64x512xbf16> to vector<64x256xbf16>
    %cst_91 = arith.constant dense<0.000000e+00> : vector<64x256xf32>
    %215 = tpu.matmul %210, %214, %cst_91 {dimension_numbers = #tpu.dot_dimension_numbers<[1], [0], [0], [1], [0, 0, 1, 1], [], []>} : vector<64x64xbf16>, vector<64x256xbf16>, vector<64x256xf32> -> vector<64x256xf32>
    %216 = vector.broadcast %213 : vector<1x256xf32> to vector<64x256xf32>
    %217 = arith.addf %215, %216 : vector<64x256xf32>
    %c0_92 = arith.constant 0 : index
    %c0_93 = arith.constant 0 : index
    %218 = vector.load %arg14[%c0_92, %c0_93] : memref<64x512xf32, #tpu.memory_space<vmem>>, vector<64x256xf32>
    tpu.vector_store %arg14[%c0_92, %c0_93], %217 {strides = array<i32>} : memref<64x512xf32, #tpu.memory_space<vmem>>, vector<64x256xf32>,
    %c56_94 = arith.constant 56 : index
    %c0_95 = arith.constant 0 : index
    %219 = vector.load %arg12[%c56_94, %c0_95] : memref<64x32xf32, #tpu.memory_space<vmem>>, vector<8x32xf32>
    %c56_96 = arith.constant 56 : index
    %c0_97 = arith.constant 0 : index
    %220 = vector.load %arg13[%c56_96, %c0_97] : memref<64x32xf32, #tpu.memory_space<vmem>>, vector<8x32xf32>
    %221 = tpu.concatenate %219, %220 in 1 : vector<8x32xf32>, vector<8x32xf32> -> vector<8x64xf32>
    %222 = arith.truncf %221 : vector<8x64xf32> to vector<8x64xbf16>
    %223 = vector.extract_strided_slice %211 {offsets = [0, 256], sizes = [64, 256], strides = [1, 1]} : vector<64x512xbf16> to vector<64x256xbf16>
    %cst_98 = arith.constant dense<0.000000e+00> : vector<8x256xf32>
    %224 = tpu.matmul %222, %223, %cst_98 {dimension_numbers = #tpu.dot_dimension_numbers<[1], [0], [0], [1], [0, 0, 1, 1], [], []>} : vector<8x64xbf16>, vector<64x256xbf16>, vector<8x256xf32> -> vector<8x256xf32>
    %cst_99 = arith.constant 0.000000e+00 : f32
    %225 = vector.broadcast %cst_99 : f32 to vector<8x64xf32>
    %cst_100 = arith.constant 0.000000e+00 : f32
    %226 = vector.broadcast %cst_100 : f32 to vector<8x64xf32>
    %c0_101 = arith.constant 0 : index
    %c0_102 = arith.constant 0 : index
    %227 = vector.load %arg14[%c0_101, %c0_102] : memref<64x512xf32, #tpu.memory_space<vmem>>, vector<8x256xf32>
    %228 = arith.truncf %225 : vector<8x64xf32> to vector<8x64xbf16>
    %cst_103 = arith.constant dense<0.000000e+00> : vector<8x256xf32>
    %229 = tpu.matmul %228, %212, %cst_103 {dimension_numbers = #tpu.dot_dimension_numbers<[1], [0], [0], [1], [0, 0, 1, 1], [], []>} : vector<8x64xbf16>, vector<64x256xbf16>, vector<8x256xf32> -> vector<8x256xf32>
    %230 = arith.addf %227, %229 : vector<8x256xf32>
    %231 = arith.addf %230, %224 : vector<8x256xf32>
    %232 = math.tanh %231 : vector<8x256xf32>
    %233 = vector.broadcast %0 : vector<1x256xf32> to vector<8x256xf32>
    %234 = arith.mulf %232, %233 : vector<8x256xf32>
    %235 = vector.broadcast %1 : vector<1x256xf32> to vector<8x256xf32>
    %236 = arith.addf %234, %235 : vector<8x256xf32>
    %237 = vector.extract_strided_slice %236 {offsets = [0, 0], sizes = [8, 64], strides = [1, 1]} : vector<8x256xf32> to vector<8x64xf32>
    %238 = vector.extract_strided_slice %236 {offsets = [0, 64], sizes = [8, 64], strides = [1, 1]} : vector<8x256xf32> to vector<8x64xf32>
    %239 = vector.extract_strided_slice %236 {offsets = [0, 128], sizes = [8, 64], strides = [1, 1]} : vector<8x256xf32> to vector<8x64xf32>
    %240 = vector.extract_strided_slice %236 {offsets = [0, 192], sizes = [8, 64], strides = [1, 1]} : vector<8x256xf32> to vector<8x64xf32>
    %241 = arith.mulf %238, %226 : vector<8x64xf32>
    %242 = arith.mulf %237, %239 : vector<8x64xf32>
    %243 = arith.addf %241, %242 : vector<8x64xf32>
    %244 = math.tanh %243 : vector<8x64xf32>
    %245 = arith.mulf %240, %244 : vector<8x64xf32>
    %246 = vector.extract_strided_slice %245 {offsets = [0, 32], sizes = [8, 32], strides = [1, 1]} : vector<8x64xf32> to vector<8x32xf32>
    %c8_104 = arith.constant 8 : index
    %c0_105 = arith.constant 0 : index
    %247 = vector.load %arg14[%c8_104, %c0_105] : memref<64x512xf32, #tpu.memory_space<vmem>>, vector<8x256xf32>
    %248 = arith.truncf %245 : vector<8x64xf32> to vector<8x64xbf16>
    %cst_106 = arith.constant dense<0.000000e+00> : vector<8x256xf32>
    %249 = tpu.matmul %248, %212, %cst_106 {dimension_numbers = #tpu.dot_dimension_numbers<[1], [0], [0], [1], [0, 0, 1, 1], [], []>} : vector<8x64xbf16>, vector<64x256xbf16>, vector<8x256xf32> -> vector<8x256xf32>
    %250 = arith.addf %247, %249 : vector<8x256xf32>
    %251 = math.tanh %250 : vector<8x256xf32>
    %252 = vector.broadcast %0 : vector<1x256xf32> to vector<8x256xf32>
    %253 = arith.mulf %251, %252 : vector<8x256xf32>
    %254 = vector.broadcast %1 : vector<1x256xf32> to vector<8x256xf32>
    %255 = arith.addf %253, %254 : vector<8x256xf32>
    %256 = vector.extract_strided_slice %255 {offsets = [0, 0], sizes = [8, 64], strides = [1, 1]} : vector<8x256xf32> to vector<8x64xf32>
    %257 = vector.extract_strided_slice %255 {offsets = [0, 64], sizes = [8, 64], strides = [1, 1]} : vector<8x256xf32> to vector<8x64xf32>
    %258 = vector.extract_strided_slice %255 {offsets = [0, 128], sizes = [8, 64], strides = [1, 1]} : vector<8x256xf32> to vector<8x64xf32>
    %259 = vector.extract_strided_slice %255 {offsets = [0, 192], sizes = [8, 64], strides = [1, 1]} : vector<8x256xf32> to vector<8x64xf32>
    %260 = arith.mulf %257, %243 : vector<8x64xf32>
    %261 = arith.mulf %256, %258 : vector<8x64xf32>
    %262 = arith.addf %260, %261 : vector<8x64xf32>
    %263 = math.tanh %262 : vector<8x64xf32>
    %264 = arith.mulf %259, %263 : vector<8x64xf32>
    %c16_107 = arith.constant 16 : index
    %c0_108 = arith.constant 0 : index
    %265 = vector.load %arg14[%c16_107, %c0_108] : memref<64x512xf32, #tpu.memory_space<vmem>>, vector<8x256xf32>
    %266 = arith.truncf %264 : vector<8x64xf32> to vector<8x64xbf16>
    %cst_109 = arith.constant dense<0.000000e+00> : vector<8x256xf32>
    %267 = tpu.matmul %266, %212, %cst_109 {dimension_numbers = #tpu.dot_dimension_numbers<[1], [0], [0], [1], [0, 0, 1, 1], [], []>} : vector<8x64xbf16>, vector<64x256xbf16>, vector<8x256xf32> -> vector<8x256xf32>
    %268 = arith.addf %265, %267 : vector<8x256xf32>
    %269 = math.tanh %268 : vector<8x256xf32>
    %270 = vector.broadcast %0 : vector<1x256xf32> to vector<8x256xf32>
    %271 = arith.mulf %269, %270 : vector<8x256xf32>
    %272 = vector.broadcast %1 : vector<1x256xf32> to vector<8x256xf32>
    %273 = arith.addf %271, %272 : vector<8x256xf32>
    %274 = vector.extract_strided_slice %273 {offsets = [0, 0], sizes = [8, 64], strides = [1, 1]} : vector<8x256xf32> to vector<8x64xf32>
    %275 = vector.extract_strided_slice %273 {offsets = [0, 64], sizes = [8, 64], strides = [1, 1]} : vector<8x256xf32> to vector<8x64xf32>
    %276 = vector.extract_strided_slice %273 {offsets = [0, 128], sizes = [8, 64], strides = [1, 1]} : vector<8x256xf32> to vector<8x64xf32>
    %277 = vector.extract_strided_slice %273 {offsets = [0, 192], sizes = [8, 64], strides = [1, 1]} : vector<8x256xf32> to vector<8x64xf32>
    %278 = arith.mulf %275, %262 : vector<8x64xf32>
    %279 = arith.mulf %274, %276 : vector<8x64xf32>
    %280 = arith.addf %278, %279 : vector<8x64xf32>
    %281 = math.tanh %280 : vector<8x64xf32>
    %282 = arith.mulf %277, %281 : vector<8x64xf32>
    %c24_110 = arith.constant 24 : index
    %c0_111 = arith.constant 0 : index
    %283 = vector.load %arg14[%c24_110, %c0_111] : memref<64x512xf32, #tpu.memory_space<vmem>>, vector<8x256xf32>
    %284 = arith.truncf %282 : vector<8x64xf32> to vector<8x64xbf16>
    %cst_112 = arith.constant dense<0.000000e+00> : vector<8x256xf32>
    %285 = tpu.matmul %284, %212, %cst_112 {dimension_numbers = #tpu.dot_dimension_numbers<[1], [0], [0], [1], [0, 0, 1, 1], [], []>} : vector<8x64xbf16>, vector<64x256xbf16>, vector<8x256xf32> -> vector<8x256xf32>
    %286 = arith.addf %283, %285 : vector<8x256xf32>
    %287 = math.tanh %286 : vector<8x256xf32>
    %288 = vector.broadcast %0 : vector<1x256xf32> to vector<8x256xf32>
    %289 = arith.mulf %287, %288 : vector<8x256xf32>
    %290 = vector.broadcast %1 : vector<1x256xf32> to vector<8x256xf32>
    %291 = arith.addf %289, %290 : vector<8x256xf32>
    %292 = vector.extract_strided_slice %291 {offsets = [0, 0], sizes = [8, 64], strides = [1, 1]} : vector<8x256xf32> to vector<8x64xf32>
    %293 = vector.extract_strided_slice %291 {offsets = [0, 64], sizes = [8, 64], strides = [1, 1]} : vector<8x256xf32> to vector<8x64xf32>
    %294 = vector.extract_strided_slice %291 {offsets = [0, 128], sizes = [8, 64], strides = [1, 1]} : vector<8x256xf32> to vector<8x64xf32>
    %295 = vector.extract_strided_slice %291 {offsets = [0, 192], sizes = [8, 64], strides = [1, 1]} : vector<8x256xf32> to vector<8x64xf32>
    %296 = arith.mulf %293, %280 : vector<8x64xf32>
    %297 = arith.mulf %292, %294 : vector<8x64xf32>
    %298 = arith.addf %296, %297 : vector<8x64xf32>
    %299 = math.tanh %298 : vector<8x64xf32>
    %300 = arith.mulf %295, %299 : vector<8x64xf32>
    %c32_113 = arith.constant 32 : index
    %c0_114 = arith.constant 0 : index
    %301 = vector.load %arg14[%c32_113, %c0_114] : memref<64x512xf32, #tpu.memory_space<vmem>>, vector<8x256xf32>
    %302 = arith.truncf %300 : vector<8x64xf32> to vector<8x64xbf16>
    %cst_115 = arith.constant dense<0.000000e+00> : vector<8x256xf32>
    %303 = tpu.matmul %302, %212, %cst_115 {dimension_numbers = #tpu.dot_dimension_numbers<[1], [0], [0], [1], [0, 0, 1, 1], [], []>} : vector<8x64xbf16>, vector<64x256xbf16>, vector<8x256xf32> -> vector<8x256xf32>
    %304 = arith.addf %301, %303 : vector<8x256xf32>
    %305 = math.tanh %304 : vector<8x256xf32>
    %306 = vector.broadcast %0 : vector<1x256xf32> to vector<8x256xf32>
    %307 = arith.mulf %305, %306 : vector<8x256xf32>
    %308 = vector.broadcast %1 : vector<1x256xf32> to vector<8x256xf32>
    %309 = arith.addf %307, %308 : vector<8x256xf32>
    %310 = vector.extract_strided_slice %309 {offsets = [0, 0], sizes = [8, 64], strides = [1, 1]} : vector<8x256xf32> to vector<8x64xf32>
    %311 = vector.extract_strided_slice %309 {offsets = [0, 64], sizes = [8, 64], strides = [1, 1]} : vector<8x256xf32> to vector<8x64xf32>
    %312 = vector.extract_strided_slice %309 {offsets = [0, 128], sizes = [8, 64], strides = [1, 1]} : vector<8x256xf32> to vector<8x64xf32>
    %313 = vector.extract_strided_slice %309 {offsets = [0, 192], sizes = [8, 64], strides = [1, 1]} : vector<8x256xf32> to vector<8x64xf32>
    %314 = arith.mulf %311, %298 : vector<8x64xf32>
    %315 = arith.mulf %310, %312 : vector<8x64xf32>
    %316 = arith.addf %314, %315 : vector<8x64xf32>
    %317 = math.tanh %316 : vector<8x64xf32>
    %318 = arith.mulf %313, %317 : vector<8x64xf32>
    %c40_116 = arith.constant 40 : index
    %c0_117 = arith.constant 0 : index
    %319 = vector.load %arg14[%c40_116, %c0_117] : memref<64x512xf32, #tpu.memory_space<vmem>>, vector<8x256xf32>
    %320 = arith.truncf %318 : vector<8x64xf32> to vector<8x64xbf16>
    %cst_118 = arith.constant dense<0.000000e+00> : vector<8x256xf32>
    %321 = tpu.matmul %320, %212, %cst_118 {dimension_numbers = #tpu.dot_dimension_numbers<[1], [0], [0], [1], [0, 0, 1, 1], [], []>} : vector<8x64xbf16>, vector<64x256xbf16>, vector<8x256xf32> -> vector<8x256xf32>
    %322 = arith.addf %319, %321 : vector<8x256xf32>
    %323 = math.tanh %322 : vector<8x256xf32>
    %324 = vector.broadcast %0 : vector<1x256xf32> to vector<8x256xf32>
    %325 = arith.mulf %323, %324 : vector<8x256xf32>
    %326 = vector.broadcast %1 : vector<1x256xf32> to vector<8x256xf32>
    %327 = arith.addf %325, %326 : vector<8x256xf32>
    %328 = vector.extract_strided_slice %327 {offsets = [0, 0], sizes = [8, 64], strides = [1, 1]} : vector<8x256xf32> to vector<8x64xf32>
    %329 = vector.extract_strided_slice %327 {offsets = [0, 64], sizes = [8, 64], strides = [1, 1]} : vector<8x256xf32> to vector<8x64xf32>
    %330 = vector.extract_strided_slice %327 {offsets = [0, 128], sizes = [8, 64], strides = [1, 1]} : vector<8x256xf32> to vector<8x64xf32>
    %331 = vector.extract_strided_slice %327 {offsets = [0, 192], sizes = [8, 64], strides = [1, 1]} : vector<8x256xf32> to vector<8x64xf32>
    %332 = arith.mulf %329, %316 : vector<8x64xf32>
    %333 = arith.mulf %328, %330 : vector<8x64xf32>
    %334 = arith.addf %332, %333 : vector<8x64xf32>
    %335 = math.tanh %334 : vector<8x64xf32>
    %336 = arith.mulf %331, %335 : vector<8x64xf32>
    %c48_119 = arith.constant 48 : index
    %c0_120 = arith.constant 0 : index
    %337 = vector.load %arg14[%c48_119, %c0_120] : memref<64x512xf32, #tpu.memory_space<vmem>>, vector<8x256xf32>
    %338 = arith.truncf %336 : vector<8x64xf32> to vector<8x64xbf16>
    %cst_121 = arith.constant dense<0.000000e+00> : vector<8x256xf32>
    %339 = tpu.matmul %338, %212, %cst_121 {dimension_numbers = #tpu.dot_dimension_numbers<[1], [0], [0], [1], [0, 0, 1, 1], [], []>} : vector<8x64xbf16>, vector<64x256xbf16>, vector<8x256xf32> -> vector<8x256xf32>
    %340 = arith.addf %337, %339 : vector<8x256xf32>
    %341 = math.tanh %340 : vector<8x256xf32>
    %342 = vector.broadcast %0 : vector<1x256xf32> to vector<8x256xf32>
    %343 = arith.mulf %341, %342 : vector<8x256xf32>
    %344 = vector.broadcast %1 : vector<1x256xf32> to vector<8x256xf32>
    %345 = arith.addf %343, %344 : vector<8x256xf32>
    %346 = vector.extract_strided_slice %345 {offsets = [0, 0], sizes = [8, 64], strides = [1, 1]} : vector<8x256xf32> to vector<8x64xf32>
    %347 = vector.extract_strided_slice %345 {offsets = [0, 64], sizes = [8, 64], strides = [1, 1]} : vector<8x256xf32> to vector<8x64xf32>
    %348 = vector.extract_strided_slice %345 {offsets = [0, 128], sizes = [8, 64], strides = [1, 1]} : vector<8x256xf32> to vector<8x64xf32>
    %349 = vector.extract_strided_slice %345 {offsets = [0, 192], sizes = [8, 64], strides = [1, 1]} : vector<8x256xf32> to vector<8x64xf32>
    %350 = arith.mulf %347, %334 : vector<8x64xf32>
    %351 = arith.mulf %346, %348 : vector<8x64xf32>
    %352 = arith.addf %350, %351 : vector<8x64xf32>
    %353 = math.tanh %352 : vector<8x64xf32>
    %354 = arith.mulf %349, %353 : vector<8x64xf32>
    %c56_122 = arith.constant 56 : index
    %c0_123 = arith.constant 0 : index
    %355 = vector.load %arg14[%c56_122, %c0_123] : memref<64x512xf32, #tpu.memory_space<vmem>>, vector<8x256xf32>
    %356 = arith.truncf %354 : vector<8x64xf32> to vector<8x64xbf16>
    %cst_124 = arith.constant dense<0.000000e+00> : vector<8x256xf32>
    %357 = tpu.matmul %356, %212, %cst_124 {dimension_numbers = #tpu.dot_dimension_numbers<[1], [0], [0], [1], [0, 0, 1, 1], [], []>} : vector<8x64xbf16>, vector<64x256xbf16>, vector<8x256xf32> -> vector<8x256xf32>
    %358 = arith.addf %355, %357 : vector<8x256xf32>
    %359 = math.tanh %358 : vector<8x256xf32>
    %360 = vector.broadcast %0 : vector<1x256xf32> to vector<8x256xf32>
    %361 = arith.mulf %359, %360 : vector<8x256xf32>
    %362 = vector.broadcast %1 : vector<1x256xf32> to vector<8x256xf32>
    %363 = arith.addf %361, %362 : vector<8x256xf32>
    %364 = vector.extract_strided_slice %363 {offsets = [0, 0], sizes = [8, 64], strides = [1, 1]} : vector<8x256xf32> to vector<8x64xf32>
    %365 = vector.extract_strided_slice %363 {offsets = [0, 64], sizes = [8, 64], strides = [1, 1]} : vector<8x256xf32> to vector<8x64xf32>
    %366 = vector.extract_strided_slice %363 {offsets = [0, 128], sizes = [8, 64], strides = [1, 1]} : vector<8x256xf32> to vector<8x64xf32>
    %367 = vector.extract_strided_slice %363 {offsets = [0, 192], sizes = [8, 64], strides = [1, 1]} : vector<8x256xf32> to vector<8x64xf32>
    %368 = arith.mulf %365, %352 : vector<8x64xf32>
    %369 = arith.mulf %364, %366 : vector<8x64xf32>
    %370 = arith.addf %368, %369 : vector<8x64xf32>
    %371 = math.tanh %370 : vector<8x64xf32>
    %372 = arith.mulf %367, %371 : vector<8x64xf32>
    %373 = vector.extract_strided_slice %372 {offsets = [0, 0], sizes = [8, 32], strides = [1, 1]} : vector<8x64xf32> to vector<8x32xf32>
    %c0_125 = arith.constant 0 : index
    %c0_126 = arith.constant 0 : index
    %374 = vector.load %arg7[%c0_125, %c0_126] : memref<64x4xf32, #tpu.memory_space<vmem>>, vector<64x4xf32>
    %375 = vector.extract_strided_slice %374 {offsets = [0, 0], sizes = [32, 4], strides = [1, 1]} : vector<64x4xf32> to vector<32x4xf32>
    %cst_127 = arith.constant dense<0.000000e+00> : vector<8x4xf32>
    %376 = tpu.matmul %373, %375, %cst_127 {dimension_numbers = #tpu.dot_dimension_numbers<[1], [0], [0], [1], [0, 0, 1, 1], [], []>} : vector<8x32xf32>, vector<32x4xf32>, vector<8x4xf32> -> vector<8x4xf32>
    %377 = vector.extract_strided_slice %374 {offsets = [32, 0], sizes = [32, 4], strides = [1, 1]} : vector<64x4xf32> to vector<32x4xf32>
    %cst_128 = arith.constant dense<0.000000e+00> : vector<8x4xf32>
    %378 = tpu.matmul %246, %377, %cst_128 {dimension_numbers = #tpu.dot_dimension_numbers<[1], [0], [0], [1], [0, 0, 1, 1], [], []>} : vector<8x32xf32>, vector<32x4xf32>, vector<8x4xf32> -> vector<8x4xf32>
    %379 = arith.addf %376, %378 : vector<8x4xf32>
    %c0_129 = arith.constant 0 : index
    %c0_130 = arith.constant 0 : index
    %380 = vector.load %arg8[%c0_129, %c0_130] : memref<1x4xf32, #tpu.memory_space<vmem>>, vector<1x4xf32>
    %381 = vector.broadcast %380 : vector<1x4xf32> to vector<8x4xf32>
    %382 = arith.addf %379, %381 : vector<8x4xf32>
    %383 = vector.extract_strided_slice %382 {offsets = [0, 0], sizes = [4, 4], strides = [1, 1]} : vector<8x4xf32> to vector<4x4xf32>
    %c0_131 = arith.constant 0 : index
    %c0_132 = arith.constant 0 : index
    %384 = vector.load %arg11[%c0_131, %c0_132] : memref<4x4xf32, #tpu.memory_space<vmem>>, vector<4x4xf32>
    tpu.vector_store %arg11[%c0_131, %c0_132], %383 {strides = array<i32>} : memref<4x4xf32, #tpu.memory_space<vmem>>, vector<4x4xf32>,
    return
  }
}

</mosaic_0001>

<llo_original>
// kernel: bidirectional_lstm_forward.1
$region0: #{bidirectional_lstm_forward.1}
  #allocation0 [shape = 'u32[]', space=smem, size = 0x4, offset = 0x4, fixed_abs, tag = 'smem constant byte address 0x4 - core index']
  #allocation1 [shape = 'u32[144,128]{1,0:T(1,128)}', space=vmem, size = 0x12000, scoped, tag = 'internal scratch']
  #allocation2 [shape = 'f32[64,32]{1,0:T(8,128)}', space=vmem, size = 0x8000, scoped, tag = 'scratch operand']
  #allocation3 [shape = 'f32[64,32]{1,0:T(8,128)}', space=vmem, size = 0x8000, scoped, tag = 'scratch operand']
  #allocation4 [shape = 'f32[64,512]{1,0:T(8,128)}', space=vmem, size = 0x20000, scoped, tag = 'scratch operand']
  %s0 = inlined_call_operand.vmem [shape: bf16[64,8], index: 0, kind: input, shape index: {}]
  %s1 = inlined_call_operand.vmem [shape: bf16[8,512], index: 1, kind: input, shape index: {}]
  %s2 = inlined_call_operand.vmem [shape: bf16[64,256], index: 2, kind: input, shape index: {}]
  %s3 = inlined_call_operand.vmem [shape: f32[1,256], index: 3, kind: input, shape index: {}]
  %s4 = inlined_call_operand.vmem [shape: bf16[64,512], index: 4, kind: input, shape index: {}]
  %s5 = inlined_call_operand.hbm [shape: bf16[64,256], index: 5, kind: input, shape index: {}]
  %s6 = inlined_call_operand.vmem [shape: f32[1,256], index: 6, kind: input, shape index: {}]
  %s7 = inlined_call_operand.vmem [shape: f32[64,4], index: 7, kind: input, shape index: {}]
  %s8 = inlined_call_operand.vmem [shape: f32[1,4], index: 8, kind: input, shape index: {}]
  %s9 = inlined_call_operand.vmem [shape: f32[1,256], index: 9, kind: input, shape index: {}]
  %s10 = inlined_call_operand.vmem [shape: f32[1,256], index: 10, kind: input, shape index: {}]
  %s11 = inlined_call_operand.hbm [shape: f32[4,4], index: 11, kind: output, shape index: {}]
  %s12 = sld [smem:[#allocation0]]
  $region58: #{bidirectional_lstm_forward.1} parent=0
    _
  %s14 = ssub.s32 1, %s12
  %s15 = scalar_select 0, %s14, %s12
  $region1: #{bidirectional_lstm_forward.1} parent=0
    #allocation5 [shape = 'u8[32768]{0}', space=vmem, size = 0x8000, scoped, tag = 'input window, operand 5, single buffered']
    #allocation6 [shape = 's32[1]{0}', space=sflag, size = 0x4, scoped, tag = 'scoped memory for bidirectional_lstm_forward.1']
    #allocation7 [shape = 's32[1]{0}', space=sflag, size = 0x4, scoped, tag = 'scoped memory for bidirectional_lstm_forward.1']
    #allocation8 [shape = 'u8[2048]{0}', space=vmem, size = 0x800, scoped, tag = 'output window, operand 0, single buffered']
    %16 = vsyncpa [#allocation6], 0
    %17 = vsyncpa [#allocation7], 0
    // Predicated region
    $region2: #{bidirectional_lstm_forward.1} parent=1 // pred_check
      _
    $region3: #{bidirectional_lstm_forward.1} parent=1 // pred_check_branch
      %19 = sbr.rel (0) target = $region5
    $region4: #{bidirectional_lstm_forward.1} parent=1 // pred_region
      _
    $region5: #{bidirectional_lstm_forward.1} parent=1 // pred_fallthru
      _
    // Predicated region
    $region6: #{bidirectional_lstm_forward.1} parent=1 // pred_check
      _
    $region7: #{bidirectional_lstm_forward.1} parent=1 // pred_check_branch
      %21 = sbr.rel (0) target = $region9
    $region8: #{bidirectional_lstm_forward.1} parent=1 // pred_region
      _
    $region9: #{bidirectional_lstm_forward.1} parent=1 // pred_fallthru
      _
    // Predicated region
    $region10: #{bidirectional_lstm_forward.1} parent=1 // pred_check
      _
    $region11: #{bidirectional_lstm_forward.1} parent=1 // pred_check_branch
      %23 = sbr.rel (0) target = $region13
    $region12: #{bidirectional_lstm_forward.1} parent=1 // pred_region
      _
    $region13: #{bidirectional_lstm_forward.1} parent=1 // pred_fallthru
      _
    // Predicated region
    $region14: #{bidirectional_lstm_forward.1} parent=1 // pred_check
      _
    $region15: #{bidirectional_lstm_forward.1} parent=1 // pred_check_branch
      %25 = sbr.rel (0) target = $region17
    $region16: #{bidirectional_lstm_forward.1} parent=1 // pred_region
      _
    $region17: #{bidirectional_lstm_forward.1} parent=1 // pred_fallthru
      _
    // Predicated region
    $region18: #{bidirectional_lstm_forward.1} parent=1 // pred_check
      _
    $region19: #{bidirectional_lstm_forward.1} parent=1 // pred_check_branch
      %27 = sbr.rel (0) target = $region21
    $region20: #{bidirectional_lstm_forward.1} parent=1 // pred_region
      _
    $region21: #{bidirectional_lstm_forward.1} parent=1 // pred_fallthru
      _
    // Predicated region
    $region22: #{bidirectional_lstm_forward.1} parent=1 // pred_check
      _
    $region23: #{bidirectional_lstm_forward.1} parent=1 // pred_check_branch
      %29 = sbr.rel (0) target = $region25
    $region24: #{bidirectional_lstm_forward.1} parent=1 // pred_region
      %s31 = ssub.s32 1024, 1024
      %32 = vsyncadd [#allocation6], %s31
      %s33 = sshll.u32 [#allocation5], 4
      %s34 = int_to_ptr.vmem [resolvable:$true] %s33
      %39 = dma.hbm_to_vmem [thread:$0]  %s5, 1024, %s34, [#allocation6], 128, 128, 8
    $region25: #{bidirectional_lstm_forward.1} parent=1 // pred_fallthru
      _
    // Predicated region
    $region26: #{bidirectional_lstm_forward.1} parent=1 // pred_check
      _
    $region27: #{bidirectional_lstm_forward.1} parent=1 // pred_check_branch
      %41 = sbr.rel (0) target = $region29
    $region28: #{bidirectional_lstm_forward.1} parent=1 // pred_region
      _
    $region29: #{bidirectional_lstm_forward.1} parent=1 // pred_fallthru
      _
    // Predicated region
    $region30: #{bidirectional_lstm_forward.1} parent=1 // pred_check
      _
    $region31: #{bidirectional_lstm_forward.1} parent=1 // pred_check_branch
      %43 = sbr.rel (0) target = $region33
    $region32: #{bidirectional_lstm_forward.1} parent=1 // pred_region
      _
    $region33: #{bidirectional_lstm_forward.1} parent=1 // pred_fallthru
      _
    // Predicated region
    $region34: #{bidirectional_lstm_forward.1} parent=1 // pred_check
      _
    $region35: #{bidirectional_lstm_forward.1} parent=1 // pred_check_branch
      %45 = sbr.rel (0) target = $region37
    $region36: #{bidirectional_lstm_forward.1} parent=1 // pred_region
      _
    $region37: #{bidirectional_lstm_forward.1} parent=1 // pred_fallthru
      _
    // Predicated region
    $region38: #{bidirectional_lstm_forward.1} parent=1 // pred_check
      _
    $region39: #{bidirectional_lstm_forward.1} parent=1 // pred_check_branch
      %47 = sbr.rel (0) target = $region41
    $region40: #{bidirectional_lstm_forward.1} parent=1 // pred_region
      _
    $region41: #{bidirectional_lstm_forward.1} parent=1 // pred_fallthru
      _
    // Predicated region
    $region42: #{bidirectional_lstm_forward.1} parent=1 // pred_check
      _
    $region43: #{bidirectional_lstm_forward.1} parent=1 // pred_check_branch
      %49 = sbr.rel (0) target = $region45
    $region44: #{bidirectional_lstm_forward.1} parent=1 // pred_region
      _
    $region45: #{bidirectional_lstm_forward.1} parent=1 // pred_fallthru
      _
    // Predicated region
    $region46: #{bidirectional_lstm_forward.1} parent=1 // pred_check
      _
    $region47: #{bidirectional_lstm_forward.1} parent=1 // pred_check_branch
      %51 = sbr.rel (0) target = $region49
    $region48: #{bidirectional_lstm_forward.1} parent=1 // pred_region
      %52 = dma.done [#allocation6], 1024
    $region49: #{bidirectional_lstm_forward.1} parent=1 // pred_fallthru
      _
    %v54 = vld [vmem:[%s9] sm:$0x3]
    %v55 = vld [vmem:[%s10] sm:$0x3]
    %v56 = vld [vmem:[%s0] sm:$0xf]
    %v57 = vld [vmem:[%s0 + $0x4] sm:$0xf]
    %v58 = vld [vmem:[%s0 + $0x8] sm:$0xf]
    %v59 = vld [vmem:[%s0 + $0xc] sm:$0xf]
    %v60 = vld [vmem:[%s0 + $0x10] sm:$0xf]
    %v61 = vld [vmem:[%s0 + $0x14] sm:$0xf]
    %v62 = vld [vmem:[%s0 + $0x18] sm:$0xf]
    %v63 = vld [vmem:[%s0 + $0x1c] sm:$0xf]
    %v64 = vld [vmem:[%s1] sm:$0xff]
    %v65 = vld [vmem:[%s1 + $0x8] sm:$0xff]
    %v66 = vld [vmem:[%s2] sm:$0xff]
    %v67 = vld [vmem:[%s2 + $0x8] sm:$0xff]
    %v68 = vld [vmem:[%s2 + $0x10] sm:$0xff]
    %v69 = vld [vmem:[%s2 + $0x18] sm:$0xff]
    %v70 = vld [vmem:[%s2 + $0x20] sm:$0xff]
    %v71 = vld [vmem:[%s2 + $0x28] sm:$0xff]
    %v72 = vld [vmem:[%s2 + $0x30] sm:$0xff]
    %v73 = vld [vmem:[%s2 + $0x38] sm:$0xff]
    %v74 = vld [vmem:[%s3] sm:$0x3]
    %v83 = vunpack.c.l.b16 %v56
    %v84 = vunpack.c.l.b16 %v57
    %v85 = vunpack.c.l.b16 %v58
    %v86 = vunpack.c.l.b16 %v59
    %v87 = vunpack.c.l.b16 %v60
    %v88 = vunpack.c.l.b16 %v61
    %v89 = vunpack.c.l.b16 %v62
    %v90 = vunpack.c.l.b16 %v63
    %v91 = vpack.c.b16 %v84, %v83
    %v92 = vpack.c.b16 %v86, %v85
    %v93 = vpack.c.b16 %v88, %v87
    %v94 = vpack.c.b16 %v90, %v89
    %v97 = vunpack.c.l.b16 %v64
    %v98 = vunpack.c.h.b16 %v64
    %v99 = vunpack.c.l.b16 %v65
    %v100 = vunpack.c.h.b16 %v65
    %v101 = vpack.c.b16 %v97, %v97
    %v102 = vpack.c.b16 %v98, %v98
    %v103 = vpack.c.b16 %v99, %v99
    %v104 = vpack.c.b16 %v100, %v100
    %vm105 = vcmask 64512
    %v107 = vsel %vm105, %v91, 0
    %v110 = vsel %vm105, %v92, 0
    %v113 = vsel %vm105, %v93, 0
    %v116 = vsel %vm105, %v94, 0
    %vm118 = vcmask 1043456
    %v120 = vsel %vm118, %v101, 0
    %v123 = vsel %vm118, %v102, 0
    %v126 = vsel %vm118, %v103, 0
    %v129 = vsel %vm118, %v104, 0
    %131 = vmatprep.subr.bf16.mxu0 %v123
    %132 = vmatpush1.bf16.msra.mxu0 %v120
    %133 = vmatprep.subr.bf16.mxu0 0
    %134 = vmatpush1.bf16.msra.mxu0 0
    %135 = vmatprep.subr.bf16.mxu0 0
    %136 = vmatpush1.bf16.msra.mxu0 0
    %137 = vmatprep.subr.bf16.mxu0 0
    %138 = vmatpush1.bf16.msra.mxu0 0
    %139 = vmatprep.subr.bf16.mxu0 0
    %140 = vmatpush1.bf16.msra.mxu0 0
    %141 = vmatprep.subr.bf16.mxu0 0
    %142 = vmatpush1.bf16.msra.mxu0 0
    %143 = vmatprep.subr.bf16.mxu0 0
    %144 = vmatpush1.bf16.msra.mxu0 0
    %145 = vmatprep.subr.bf16.mxu0 0
    %146 = vmatpush1.bf16.msra.mxu0 0
    %147 = vmatprep.subr.bf16.mxu0 0
    %148 = vmatpush1.bf16.msra.mxu0 0
    %149 = vmatprep.subr.bf16.mxu0 0
    %150 = vmatpush1.bf16.msra.mxu0 0
    %151 = vmatprep.subr.bf16.mxu0 0
    %152 = vmatpush1.bf16.msra.mxu0 0
    %153 = vmatprep.subr.bf16.mxu0 0
    %154 = vmatpush1.bf16.msra.mxu0 0
    %155 = vmatprep.subr.bf16.mxu0 0
    %156 = vmatpush1.bf16.msra.mxu0 0
    %157 = vmatprep.subr.bf16.mxu0 0
    %158 = vmatpush1.bf16.msra.mxu0 0
    %159 = vmatprep.subr.bf16.mxu0 0
    %160 = vmatpush1.bf16.msra.mxu0 0
    %161 = vmatprep.subr.bf16.mxu0 0
    %162 = vmatpush1.bf16.msra.mxu0 0
    %163 = vmatprep.mubr.bf16.mxu0 0
    %164 = vmatmul.mubr.bf16.gmra.mrb[0].mxu0 %v107
    %v165 = vpop.f32.mrb[0].mxu0
    %v166 = vadd.f32 0.0, %v165
    %v167 = vpop.f32.mrb[0].mxu0
    %v168 = vadd.f32 0.0, %v167
    %v169 = vpop.f32.mrb[0].mxu0
    %v170 = vadd.f32 0.0, %v169
    %v171 = vpop.f32.mrb[0].mxu0
    %v172 = vadd.f32 0.0, %v171
    %173 = vmatprep.mubr.bf16.mxu0 0
    %174 = vmatmul.mubr.bf16.gmra.mrb[0].mxu0 %v110
    %v175 = vpop.f32.mrb[0].mxu0
    %v176 = vadd.f32 0.0, %v175
    %v177 = vpop.f32.mrb[0].mxu0
    %v178 = vadd.f32 0.0, %v177
    %v179 = vpop.f32.mrb[0].mxu0
    %v180 = vadd.f32 0.0, %v179
    %v181 = vpop.f32.mrb[0].mxu0
    %v182 = vadd.f32 0.0, %v181
    %183 = vmatprep.mubr.bf16.mxu0 0
    %184 = vmatmul.mubr.bf16.gmra.mrb[0].mxu0 %v113
    %v185 = vpop.f32.mrb[0].mxu0
    %v186 = vadd.f32 0.0, %v185
    %v187 = vpop.f32.mrb[0].mxu0
    %v188 = vadd.f32 0.0, %v187
    %v189 = vpop.f32.mrb[0].mxu0
    %v190 = vadd.f32 0.0, %v189
    %v191 = vpop.f32.mrb[0].mxu0
    %v192 = vadd.f32 0.0, %v191
    %193 = vmatprep.mubr.bf16.mxu0 0
    %194 = vmatmul.mubr.bf16.gmra.mrb[0].mxu0 %v116
    %v195 = vpop.f32.mrb[0].mxu0
    %v196 = vadd.f32 0.0, %v195
    %v197 = vpop.f32.mrb[0].mxu0
    %v198 = vadd.f32 0.0, %v197
    %v199 = vpop.f32.mrb[0].mxu0
    %v200 = vadd.f32 0.0, %v199
    %v201 = vpop.f32.mrb[0].mxu0
    %v202 = vadd.f32 0.0, %v201
    %203 = vdwg.mxu0
    %204 = vmatprep.subr.bf16.mxu0 %v129
    %205 = vmatpush1.bf16.msra.mxu0 %v126
    %206 = vmatprep.subr.bf16.mxu0 0
    %207 = vmatpush1.bf16.msra.mxu0 0
    %208 = vmatprep.subr.bf16.mxu0 0
    %209 = vmatpush1.bf16.msra.mxu0 0
    %210 = vmatprep.subr.bf16.mxu0 0
    %211 = vmatpush1.bf16.msra.mxu0 0
    %212 = vmatprep.subr.bf16.mxu0 0
    %213 = vmatpush1.bf16.msra.mxu0 0
    %214 = vmatprep.subr.bf16.mxu0 0
    %215 = vmatpush1.bf16.msra.mxu0 0
    %216 = vmatprep.subr.bf16.mxu0 0
    %217 = vmatpush1.bf16.msra.mxu0 0
    %218 = vmatprep.subr.bf16.mxu0 0
    %219 = vmatpush1.bf16.msra.mxu0 0
    %220 = vmatprep.subr.bf16.mxu0 0
    %221 = vmatpush1.bf16.msra.mxu0 0
    %222 = vmatprep.subr.bf16.mxu0 0
    %223 = vmatpush1.bf16.msra.mxu0 0
    %224 = vmatprep.subr.bf16.mxu0 0
    %225 = vmatpush1.bf16.msra.mxu0 0
    %226 = vmatprep.subr.bf16.mxu0 0
    %227 = vmatpush1.bf16.msra.mxu0 0
    %228 = vmatprep.subr.bf16.mxu0 0
    %229 = vmatpush1.bf16.msra.mxu0 0
    %230 = vmatprep.subr.bf16.mxu0 0
    %231 = vmatpush1.bf16.msra.mxu0 0
    %232 = vmatprep.subr.bf16.mxu0 0
    %233 = vmatpush1.bf16.msra.mxu0 0
    %234 = vmatprep.subr.bf16.mxu0 0
    %235 = vmatpush1.bf16.msra.mxu0 0
    %236 = vmatprep.mubr.bf16.mxu0 0
    %237 = vmatmul.mubr.bf16.gmra.mrb[0].mxu0 %v107
    %v238 = vpop.f32.mrb[0].mxu0
    %v239 = vadd.f32 0.0, %v238
    %v240 = vpop.f32.mrb[0].mxu0
    %v241 = vadd.f32 0.0, %v240
    %v242 = vpop.f32.mrb[0].mxu0
    %v243 = vadd.f32 0.0, %v242
    %v244 = vpop.f32.mrb[0].mxu0
    %v245 = vadd.f32 0.0, %v244
    %246 = vmatprep.mubr.bf16.mxu0 0
    %247 = vmatmul.mubr.bf16.gmra.mrb[0].mxu0 %v110
    %v248 = vpop.f32.mrb[0].mxu0
    %v249 = vadd.f32 0.0, %v248
    %v250 = vpop.f32.mrb[0].mxu0
    %v251 = vadd.f32 0.0, %v250
    %v252 = vpop.f32.mrb[0].mxu0
    %v253 = vadd.f32 0.0, %v252
    %v254 = vpop.f32.mrb[0].mxu0
    %v255 = vadd.f32 0.0, %v254
    %256 = vmatprep.mubr.bf16.mxu0 0
    %257 = vmatmul.mubr.bf16.gmra.mrb[0].mxu0 %v113
    %v258 = vpop.f32.mrb[0].mxu0
    %v259 = vadd.f32 0.0, %v258
    %v260 = vpop.f32.mrb[0].mxu0
    %v261 = vadd.f32 0.0, %v260
    %v262 = vpop.f32.mrb[0].mxu0
    %v263 = vadd.f32 0.0, %v262
    %v264 = vpop.f32.mrb[0].mxu0
    %v265 = vadd.f32 0.0, %v264
    %266 = vmatprep.mubr.bf16.mxu0 0
    %267 = vmatmul.mubr.bf16.gmra.mrb[0].mxu0 %v116
    %v268 = vpop.f32.mrb[0].mxu0
    %v269 = vadd.f32 0.0, %v268
    %v270 = vpop.f32.mrb[0].mxu0
    %v271 = vadd.f32 0.0, %v270
    %v272 = vpop.f32.mrb[0].mxu0
    %v273 = vadd.f32 0.0, %v272
    %v274 = vpop.f32.mrb[0].mxu0
    %v275 = vadd.f32 0.0, %v274
    %276 = vdwg.mxu0
    %v278 = vlaneseq
    %v279 = vshrl.u32 %v278, 7
    %v280 = vsub.s32 0, %v279
    %v281 = vrot.slane %v74, %v280
    %v282 = vlaneseq
    %v283 = vshrl.u32 %v282, 7
    %v284 = vsub.s32 1, %v283
    %v285 = vrot.slane %v74, %v284
    %v288 = vadd.f32 %v166, %v281
    %v289 = vadd.f32 %v168, %v285
    %v290 = vadd.f32 %v170, %v281
    %v291 = vadd.f32 %v172, %v285
    %v292 = vadd.f32 %v176, %v281
    %v293 = vadd.f32 %v178, %v285
    %v294 = vadd.f32 %v180, %v281
    %v295 = vadd.f32 %v182, %v285
    %v296 = vadd.f32 %v186, %v281
    %v297 = vadd.f32 %v188, %v285
    %v298 = vadd.f32 %v190, %v281
    %v299 = vadd.f32 %v192, %v285
    %v300 = vadd.f32 %v196, %v281
    %v301 = vadd.f32 %v198, %v285
    %v302 = vadd.f32 %v200, %v281
    %v303 = vadd.f32 %v202, %v285
    %304 = vst [vmem:[#allocation4] sm:$0xff] %v288
    %305 = vst [vmem:[#allocation4 + $0x8] sm:$0xff] %v289
    %306 = vst [vmem:[#allocation4 + $0x20] sm:$0xff] %v290
    %307 = vst [vmem:[#allocation4 + $0x28] sm:$0xff] %v291
    %308 = vst [vmem:[#allocation4 + $0x40] sm:$0xff] %v292
    %309 = vst [vmem:[#allocation4 + $0x48] sm:$0xff] %v293
    %310 = vst [vmem:[#allocation4 + $0x60] sm:$0xff] %v294
    %311 = vst [vmem:[#allocation4 + $0x68] sm:$0xff] %v295
    %312 = vst [vmem:[#allocation4 + $0x80] sm:$0xff] %v296
    %313 = vst [vmem:[#allocation4 + $0x88] sm:$0xff] %v297
    %314 = vst [vmem:[#allocation4 + $0xa0] sm:$0xff] %v298
    %315 = vst [vmem:[#allocation4 + $0xa8] sm:$0xff] %v299
    %316 = vst [vmem:[#allocation4 + $0xc0] sm:$0xff] %v300
    %317 = vst [vmem:[#allocation4 + $0xc8] sm:$0xff] %v301
    %318 = vst [vmem:[#allocation4 + $0xe0] sm:$0xff] %v302
    %319 = vst [vmem:[#allocation4 + $0xe8] sm:$0xff] %v303
    %320 = vst [vmem:[#allocation4 + $0x10] sm:$0xff] %v239
    %321 = vst [vmem:[#allocation4 + $0x18] sm:$0xff] %v241
    %322 = vst [vmem:[#allocation4 + $0x30] sm:$0xff] %v243
    %323 = vst [vmem:[#allocation4 + $0x38] sm:$0xff] %v245
    %324 = vst [vmem:[#allocation4 + $0x50] sm:$0xff] %v249
    %325 = vst [vmem:[#allocation4 + $0x58] sm:$0xff] %v251
    %326 = vst [vmem:[#allocation4 + $0x70] sm:$0xff] %v253
    %327 = vst [vmem:[#allocation4 + $0x78] sm:$0xff] %v255
    %328 = vst [vmem:[#allocation4 + $0x90] sm:$0xff] %v259
    %329 = vst [vmem:[#allocation4 + $0x98] sm:$0xff] %v261
    %330 = vst [vmem:[#allocation4 + $0xb0] sm:$0xff] %v263
    %331 = vst [vmem:[#allocation4 + $0xb8] sm:$0xff] %v265
    %332 = vst [vmem:[#allocation4 + $0xd0] sm:$0xff] %v269
    %333 = vst [vmem:[#allocation4 + $0xd8] sm:$0xff] %v271
    %334 = vst [vmem:[#allocation4 + $0xf0] sm:$0xff] %v273
    %335 = vst [vmem:[#allocation4 + $0xf8] sm:$0xff] %v275
    %v336 = vld [vmem:[#allocation4] sm:$0xff]
    %v337 = vld [vmem:[#allocation4 + $0x8] sm:$0xff]
    %v346 = vunpack.c.l.b16 %v66
    %v347 = vunpack.c.h.b16 %v66
    %v348 = vunpack.c.l.b16 %v67
    %v349 = vunpack.c.h.b16 %v67
    %v350 = vunpack.c.l.b16 %v68
    %v351 = vunpack.c.h.b16 %v68
    %v352 = vunpack.c.l.b16 %v69
    %v353 = vunpack.c.h.b16 %v69
    %v354 = vunpack.c.l.b16 %v70
    %v355 = vunpack.c.h.b16 %v70
    %v356 = vunpack.c.l.b16 %v71
    %v357 = vunpack.c.h.b16 %v71
    %v358 = vunpack.c.l.b16 %v72
    %v359 = vunpack.c.h.b16 %v72
    %v360 = vunpack.c.l.b16 %v73
    %v361 = vunpack.c.h.b16 %v73
    %v362 = vpack.c.b16 %v348, %v346
    %v363 = vpack.c.b16 %v349, %v347
    %v364 = vpack.c.b16 %v352, %v350
    %v365 = vpack.c.b16 %v353, %v351
    %v366 = vpack.c.b16 %v356, %v354
    %v367 = vpack.c.b16 %v357, %v355
    %v368 = vpack.c.b16 %v360, %v358
    %v369 = vpack.c.b16 %v361, %v359
    %vm378 = vcmask 523264
    %v380 = vsel %vm378, 0, 0
    %382 = vmatprep.subr.bf16.mxu0 %v363
    %383 = vmatpush1.bf16.msra.mxu0 %v362
    %384 = vmatprep.subr.bf16.mxu0 %v365
    %385 = vmatpush1.bf16.msra.mxu0 %v364
    %386 = vmatprep.subr.bf16.mxu0 %v367
    %387 = vmatpush1.bf16.msra.mxu0 %v366
    %388 = vmatprep.subr.bf16.mxu0 %v369
    %389 = vmatpush1.bf16.msra.mxu0 %v368
    %390 = vmatprep.subr.bf16.mxu0 0
    %391 = vmatpush1.bf16.msra.mxu0 0
    %392 = vmatprep.subr.bf16.mxu0 0
    %393 = vmatpush1.bf16.msra.mxu0 0
    %394 = vmatprep.subr.bf16.mxu0 0
    %395 = vmatpush1.bf16.msra.mxu0 0
    %396 = vmatprep.subr.bf16.mxu0 0
    %397 = vmatpush1.bf16.msra.mxu0 0
    %398 = vmatprep.subr.bf16.mxu0 0
    %399 = vmatpush1.bf16.msra.mxu0 0
    %400 = vmatprep.subr.bf16.mxu0 0
    %401 = vmatpush1.bf16.msra.mxu0 0
    %402 = vmatprep.subr.bf16.mxu0 0
    %403 = vmatpush1.bf16.msra.mxu0 0
    %404 = vmatprep.subr.bf16.mxu0 0
    %405 = vmatpush1.bf16.msra.mxu0 0
    %406 = vmatprep.subr.bf16.mxu0 0
    %407 = vmatpush1.bf16.msra.mxu0 0
    %408 = vmatprep.subr.bf16.mxu0 0
    %409 = vmatpush1.bf16.msra.mxu0 0
    %410 = vmatprep.subr.bf16.mxu0 0
    %411 = vmatpush1.bf16.msra.mxu0 0
    %412 = vmatprep.subr.bf16.mxu0 0
    %413 = vmatpush1.bf16.msra.mxu0 0
    %414 = vmatprep.mubr.bf16.mxu0 0
    %415 = vmatmul.mubr.bf16.gmra.mrb[0].mxu0 %v380
    %v416 = vpop.f32.mrb[0].mxu0
    %v417 = vadd.f32 0.0, %v416
    %v418 = vpop.f32.mrb[0].mxu0
    %v419 = vadd.f32 0.0, %v418
    %v420 = vpop.f32.mrb[0].mxu0
    %v421 = vpop.f32.mrb[0].mxu0
    %422 = vdwg.mxu0
    %v423 = vadd.f32 %v336, %v417
    %v424 = vadd.f32 %v337, %v419
    %v425 = vld [vmem:[#allocation4 + $0xf0] sm:$0xff]
    %v426 = vld [vmem:[#allocation4 + $0xf8] sm:$0xff]
    %v427 = vadd.f32 %v423, %v425
    %v428 = vadd.f32 %v424, %v426
    %v429 = vtanh.pop %v427
    %v430 = vtanh.pop %v428
    %v432 = vlaneseq
    %v433 = vshrl.u32 %v432, 7
    %v434 = vsub.s32 0, %v433
    %v435 = vrot.slane %v54, %v434
    %v436 = vlaneseq
    %v437 = vshrl.u32 %v436, 7
    %v438 = vsub.s32 1, %v437
    %v439 = vrot.slane %v54, %v438
    %v442 = vmul.f32 %v429, %v435
    %v443 = vmul.f32 %v430, %v439
    %v445 = vlaneseq
    %v446 = vshrl.u32 %v445, 7
    %v447 = vsub.s32 0, %v446
    %v448 = vrot.slane %v55, %v447
    %v449 = vlaneseq
    %v450 = vshrl.u32 %v449, 7
    %v451 = vsub.s32 1, %v450
    %v452 = vrot.slane %v55, %v451
    %v455 = vadd.f32 %v442, %v448
    %v456 = vadd.f32 %v443, %v452
    %v457 = vmul.f32 %v455, 0.0
    %v458 = vmul.f32 %v455, %v456
    %460 = vrot.lane.b32.xlu0 %v458, 64
    %v461 = vpop.permute.xlu0 %460
    %v463 = vadd.f32 %v457, %v461
    %v464 = vtanh.pop %v463
    %v465 = vmul.f32 %v456, %v464
    %467 = vrot.lane.b32.xlu0 %v465, 64
    %v468 = vpop.permute.xlu0 %467
    %vm470 = vcmask 261120
    %471 = vst.msk [vmem:[#allocation2] sm:$0xff] %vm470, %v468
    %472 = vrot.lane.b32.xlu0 %v465, 32
    %v473 = vpop.permute.xlu0 %472
    %475 = vst.msk [vmem:[#allocation3 + $0x38] sm:$0xff] %vm470, %v473
    %v476 = vld [vmem:[#allocation4 + $0x20] sm:$0xff]
    %v477 = vld [vmem:[#allocation4 + $0x28] sm:$0xff]
    %v478 = vpack.c.bf16 %v465, %v465
    %480 = vrot.lane.b32.xlu0 %v478, 64
    %v481 = vpop.permute.xlu0 %480
    %v483 = vsel %vm378, %v481, 0
    %485 = vmatprep.subr.bf16.mxu0 %v363
    %486 = vmatpush1.bf16.msra.mxu0 %v362
    %487 = vmatprep.subr.bf16.mxu0 %v365
    %488 = vmatpush1.bf16.msra.mxu0 %v364
    %489 = vmatprep.subr.bf16.mxu0 %v367
    %490 = vmatpush1.bf16.msra.mxu0 %v366
    %491 = vmatprep.subr.bf16.mxu0 %v369
    %492 = vmatpush1.bf16.msra.mxu0 %v368
    %493 = vmatprep.subr.bf16.mxu0 0
    %494 = vmatpush1.bf16.msra.mxu0 0
    %495 = vmatprep.subr.bf16.mxu0 0
    %496 = vmatpush1.bf16.msra.mxu0 0
    %497 = vmatprep.subr.bf16.mxu0 0
    %498 = vmatpush1.bf16.msra.mxu0 0
    %499 = vmatprep.subr.bf16.mxu0 0
    %500 = vmatpush1.bf16.msra.mxu0 0
    %501 = vmatprep.subr.bf16.mxu0 0
    %502 = vmatpush1.bf16.msra.mxu0 0
    %503 = vmatprep.subr.bf16.mxu0 0
    %504 = vmatpush1.bf16.msra.mxu0 0
    %505 = vmatprep.subr.bf16.mxu0 0
    %506 = vmatpush1.bf16.msra.mxu0 0
    %507 = vmatprep.subr.bf16.mxu0 0
    %508 = vmatpush1.bf16.msra.mxu0 0
    %509 = vmatprep.subr.bf16.mxu0 0
    %510 = vmatpush1.bf16.msra.mxu0 0
    %511 = vmatprep.subr.bf16.mxu0 0
    %512 = vmatpush1.bf16.msra.mxu0 0
    %513 = vmatprep.subr.bf16.mxu0 0
    %514 = vmatpush1.bf16.msra.mxu0 0
    %515 = vmatprep.subr.bf16.mxu0 0
    %516 = vmatpush1.bf16.msra.mxu0 0
    %517 = vmatprep.mubr.bf16.mxu0 0
    %518 = vmatmul.mubr.bf16.gmra.mrb[0].mxu0 %v483
    %v519 = vpop.f32.mrb[0].mxu0
    %v520 = vadd.f32 0.0, %v519
    %v521 = vpop.f32.mrb[0].mxu0
    %v522 = vadd.f32 0.0, %v521
    %v523 = vpop.f32.mrb[0].mxu0
    %v524 = vpop.f32.mrb[0].mxu0
    %525 = vdwg.mxu0
    %v526 = vadd.f32 %v476, %v520
    %v527 = vadd.f32 %v477, %v522
    %v528 = vld [vmem:[#allocation4 + $0xd0] sm:$0xff]
    %v529 = vld [vmem:[#allocation4 + $0xd8] sm:$0xff]
    %v530 = vadd.f32 %v526, %v528
    %v531 = vadd.f32 %v527, %v529
    %v532 = vtanh.pop %v530
    %v533 = vtanh.pop %v531
    %v534 = vmul.f32 %v532, %v435
    %v535 = vmul.f32 %v533, %v439
    %v536 = vadd.f32 %v534, %v448
    %v537 = vadd.f32 %v535, %v452
    %v538 = vmul.f32 %v536, %v463
    %v539 = vmul.f32 %v536, %v537
    %541 = vrot.lane.b32.xlu0 %v539, 64
    %v542 = vpop.permute.xlu0 %541
    %v544 = vadd.f32 %v538, %v542
    %v545 = vtanh.pop %v544
    %v546 = vmul.f32 %v537, %v545
    %548 = vrot.lane.b32.xlu0 %v546, 64
    %v549 = vpop.permute.xlu0 %548
    %551 = vst.msk [vmem:[#allocation2 + $0x8] sm:$0xff] %vm470, %v549
    %552 = vrot.lane.b32.xlu0 %v546, 32
    %v553 = vpop.permute.xlu0 %552
    %555 = vst.msk [vmem:[#allocation3 + $0x30] sm:$0xff] %vm470, %v553
    %v556 = vld [vmem:[#allocation4 + $0x40] sm:$0xff]
    %v557 = vld [vmem:[#allocation4 + $0x48] sm:$0xff]
    %v558 = vpack.c.bf16 %v546, %v546
    %560 = vrot.lane.b32.xlu0 %v558, 64
    %v561 = vpop.permute.xlu0 %560
    %v563 = vsel %vm378, %v561, 0
    %565 = vmatprep.subr.bf16.mxu0 %v363
    %566 = vmatpush1.bf16.msra.mxu0 %v362
    %567 = vmatprep.subr.bf16.mxu0 %v365
    %568 = vmatpush1.bf16.msra.mxu0 %v364
    %569 = vmatprep.subr.bf16.mxu0 %v367
    %570 = vmatpush1.bf16.msra.mxu0 %v366
    %571 = vmatprep.subr.bf16.mxu0 %v369
    %572 = vmatpush1.bf16.msra.mxu0 %v368
    %573 = vmatprep.subr.bf16.mxu0 0
    %574 = vmatpush1.bf16.msra.mxu0 0
    %575 = vmatprep.subr.bf16.mxu0 0
    %576 = vmatpush1.bf16.msra.mxu0 0
    %577 = vmatprep.subr.bf16.mxu0 0
    %578 = vmatpush1.bf16.msra.mxu0 0
    %579 = vmatprep.subr.bf16.mxu0 0
    %580 = vmatpush1.bf16.msra.mxu0 0
    %581 = vmatprep.subr.bf16.mxu0 0
    %582 = vmatpush1.bf16.msra.mxu0 0
    %583 = vmatprep.subr.bf16.mxu0 0
    %584 = vmatpush1.bf16.msra.mxu0 0
    %585 = vmatprep.subr.bf16.mxu0 0
    %586 = vmatpush1.bf16.msra.mxu0 0
    %587 = vmatprep.subr.bf16.mxu0 0
    %588 = vmatpush1.bf16.msra.mxu0 0
    %589 = vmatprep.subr.bf16.mxu0 0
    %590 = vmatpush1.bf16.msra.mxu0 0
    %591 = vmatprep.subr.bf16.mxu0 0
    %592 = vmatpush1.bf16.msra.mxu0 0
    %593 = vmatprep.subr.bf16.mxu0 0
    %594 = vmatpush1.bf16.msra.mxu0 0
    %595 = vmatprep.subr.bf16.mxu0 0
    %596 = vmatpush1.bf16.msra.mxu0 0
    %597 = vmatprep.mubr.bf16.mxu0 0
    %598 = vmatmul.mubr.bf16.gmra.mrb[0].mxu0 %v563
    %v599 = vpop.f32.mrb[0].mxu0
    %v600 = vadd.f32 0.0, %v599
    %v601 = vpop.f32.mrb[0].mxu0
    %v602 = vadd.f32 0.0, %v601
    %v603 = vpop.f32.mrb[0].mxu0
    %v604 = vpop.f32.mrb[0].mxu0
    %605 = vdwg.mxu0
    %v606 = vadd.f32 %v556, %v600
    %v607 = vadd.f32 %v557, %v602
    %v608 = vld [vmem:[#allocation4 + $0xb0] sm:$0xff]
    %v609 = vld [vmem:[#allocation4 + $0xb8] sm:$0xff]
    %v610 = vadd.f32 %v606, %v608
    %v611 = vadd.f32 %v607, %v609
    %v612 = vtanh.pop %v610
    %v613 = vtanh.pop %v611
    %v614 = vmul.f32 %v612, %v435
    %v615 = vmul.f32 %v613, %v439
    %v616 = vadd.f32 %v614, %v448
    %v617 = vadd.f32 %v615, %v452
    %v618 = vmul.f32 %v616, %v544
    %v619 = vmul.f32 %v616, %v617
    %621 = vrot.lane.b32.xlu0 %v619, 64
    %v622 = vpop.permute.xlu0 %621
    %v624 = vadd.f32 %v618, %v622
    %v625 = vtanh.pop %v624
    %v626 = vmul.f32 %v617, %v625
    %628 = vrot.lane.b32.xlu0 %v626, 64
    %v629 = vpop.permute.xlu0 %628
    %631 = vst.msk [vmem:[#allocation2 + $0x10] sm:$0xff] %vm470, %v629
    %632 = vrot.lane.b32.xlu0 %v626, 32
    %v633 = vpop.permute.xlu0 %632
    %635 = vst.msk [vmem:[#allocation3 + $0x28] sm:$0xff] %vm470, %v633
    %v636 = vld [vmem:[#allocation4 + $0x60] sm:$0xff]
    %v637 = vld [vmem:[#allocation4 + $0x68] sm:$0xff]
    %v638 = vpack.c.bf16 %v626, %v626
    %640 = vrot.lane.b32.xlu0 %v638, 64
    %v641 = vpop.permute.xlu0 %640
    %v643 = vsel %vm378, %v641, 0
    %645 = vmatprep.subr.bf16.mxu0 %v363
    %646 = vmatpush1.bf16.msra.mxu0 %v362
    %647 = vmatprep.subr.bf16.mxu0 %v365
    %648 = vmatpush1.bf16.msra.mxu0 %v364
    %649 = vmatprep.subr.bf16.mxu0 %v367
    %650 = vmatpush1.bf16.msra.mxu0 %v366
    %651 = vmatprep.subr.bf16.mxu0 %v369
    %652 = vmatpush1.bf16.msra.mxu0 %v368
    %653 = vmatprep.subr.bf16.mxu0 0
    %654 = vmatpush1.bf16.msra.mxu0 0
    %655 = vmatprep.subr.bf16.mxu0 0
    %656 = vmatpush1.bf16.msra.mxu0 0
    %657 = vmatprep.subr.bf16.mxu0 0
    %658 = vmatpush1.bf16.msra.mxu0 0
    %659 = vmatprep.subr.bf16.mxu0 0
    %660 = vmatpush1.bf16.msra.mxu0 0
    %661 = vmatprep.subr.bf16.mxu0 0
    %662 = vmatpush1.bf16.msra.mxu0 0
    %663 = vmatprep.subr.bf16.mxu0 0
    %664 = vmatpush1.bf16.msra.mxu0 0
    %665 = vmatprep.subr.bf16.mxu0 0
    %666 = vmatpush1.bf16.msra.mxu0 0
    %667 = vmatprep.subr.bf16.mxu0 0
    %668 = vmatpush1.bf16.msra.mxu0 0
    %669 = vmatprep.subr.bf16.mxu0 0
    %670 = vmatpush1.bf16.msra.mxu0 0
    %671 = vmatprep.subr.bf16.mxu0 0
    %672 = vmatpush1.bf16.msra.mxu0 0
    %673 = vmatprep.subr.bf16.mxu0 0
    %674 = vmatpush1.bf16.msra.mxu0 0
    %675 = vmatprep.subr.bf16.mxu0 0
    %676 = vmatpush1.bf16.msra.mxu0 0
    %677 = vmatprep.mubr.bf16.mxu0 0
    %678 = vmatmul.mubr.bf16.gmra.mrb[0].mxu0 %v643
    %v679 = vpop.f32.mrb[0].mxu0
    %v680 = vadd.f32 0.0, %v679
    %v681 = vpop.f32.mrb[0].mxu0
    %v682 = vadd.f32 0.0, %v681
    %v683 = vpop.f32.mrb[0].mxu0
    %v684 = vpop.f32.mrb[0].mxu0
    %685 = vdwg.mxu0
    %v686 = vadd.f32 %v636, %v680
    %v687 = vadd.f32 %v637, %v682
    %v688 = vld [vmem:[#allocation4 + $0x90] sm:$0xff]
    %v689 = vld [vmem:[#allocation4 + $0x98] sm:$0xff]
    %v690 = vadd.f32 %v686, %v688
    %v691 = vadd.f32 %v687, %v689
    %v692 = vtanh.pop %v690
    %v693 = vtanh.pop %v691
    %v694 = vmul.f32 %v692, %v435
    %v695 = vmul.f32 %v693, %v439
    %v696 = vadd.f32 %v694, %v448
    %v697 = vadd.f32 %v695, %v452
    %v698 = vmul.f32 %v696, %v624
    %v699 = vmul.f32 %v696, %v697
    %701 = vrot.lane.b32.xlu0 %v699, 64
    %v702 = vpop.permute.xlu0 %701
    %v704 = vadd.f32 %v698, %v702
    %v705 = vtanh.pop %v704
    %v706 = vmul.f32 %v697, %v705
    %708 = vrot.lane.b32.xlu0 %v706, 64
    %v709 = vpop.permute.xlu0 %708
    %711 = vst.msk [vmem:[#allocation2 + $0x18] sm:$0xff] %vm470, %v709
    %712 = vrot.lane.b32.xlu0 %v706, 32
    %v713 = vpop.permute.xlu0 %712
    %715 = vst.msk [vmem:[#allocation3 + $0x20] sm:$0xff] %vm470, %v713
    %v716 = vld [vmem:[#allocation4 + $0x80] sm:$0xff]
    %v717 = vld [vmem:[#allocation4 + $0x88] sm:$0xff]
    %v718 = vpack.c.bf16 %v706, %v706
    %720 = vrot.lane.b32.xlu0 %v718, 64
    %v721 = vpop.permute.xlu0 %720
    %v723 = vsel %vm378, %v721, 0
    %725 = vmatprep.subr.bf16.mxu0 %v363
    %726 = vmatpush1.bf16.msra.mxu0 %v362
    %727 = vmatprep.subr.bf16.mxu0 %v365
    %728 = vmatpush1.bf16.msra.mxu0 %v364
    %729 = vmatprep.subr.bf16.mxu0 %v367
    %730 = vmatpush1.bf16.msra.mxu0 %v366
    %731 = vmatprep.subr.bf16.mxu0 %v369
    %732 = vmatpush1.bf16.msra.mxu0 %v368
    %733 = vmatprep.subr.bf16.mxu0 0
    %734 = vmatpush1.bf16.msra.mxu0 0
    %735 = vmatprep.subr.bf16.mxu0 0
    %736 = vmatpush1.bf16.msra.mxu0 0
    %737 = vmatprep.subr.bf16.mxu0 0
    %738 = vmatpush1.bf16.msra.mxu0 0
    %739 = vmatprep.subr.bf16.mxu0 0
    %740 = vmatpush1.bf16.msra.mxu0 0
    %741 = vmatprep.subr.bf16.mxu0 0
    %742 = vmatpush1.bf16.msra.mxu0 0
    %743 = vmatprep.subr.bf16.mxu0 0
    %744 = vmatpush1.bf16.msra.mxu0 0
    %745 = vmatprep.subr.bf16.mxu0 0
    %746 = vmatpush1.bf16.msra.mxu0 0
    %747 = vmatprep.subr.bf16.mxu0 0
    %748 = vmatpush1.bf16.msra.mxu0 0
    %749 = vmatprep.subr.bf16.mxu0 0
    %750 = vmatpush1.bf16.msra.mxu0 0
    %751 = vmatprep.subr.bf16.mxu0 0
    %752 = vmatpush1.bf16.msra.mxu0 0
    %753 = vmatprep.subr.bf16.mxu0 0
    %754 = vmatpush1.bf16.msra.mxu0 0
    %755 = vmatprep.subr.bf16.mxu0 0
    %756 = vmatpush1.bf16.msra.mxu0 0
    %757 = vmatprep.mubr.bf16.mxu0 0
    %758 = vmatmul.mubr.bf16.gmra.mrb[0].mxu0 %v723
    %v759 = vpop.f32.mrb[0].mxu0
    %v760 = vadd.f32 0.0, %v759
    %v761 = vpop.f32.mrb[0].mxu0
    %v762 = vadd.f32 0.0, %v761
    %v763 = vpop.f32.mrb[0].mxu0
    %v764 = vpop.f32.mrb[0].mxu0
    %765 = vdwg.mxu0
    %v766 = vadd.f32 %v716, %v760
    %v767 = vadd.f32 %v717, %v762
    %v768 = vld [vmem:[#allocation4 + $0x70] sm:$0xff]
    %v769 = vld [vmem:[#allocation4 + $0x78] sm:$0xff]
    %v770 = vadd.f32 %v766, %v768
    %v771 = vadd.f32 %v767, %v769
    %v772 = vtanh.pop %v770
    %v773 = vtanh.pop %v771
    %v774 = vmul.f32 %v772, %v435
    %v775 = vmul.f32 %v773, %v439
    %v776 = vadd.f32 %v774, %v448
    %v777 = vadd.f32 %v775, %v452
    %v778 = vmul.f32 %v776, %v704
    %v779 = vmul.f32 %v776, %v777
    %781 = vrot.lane.b32.xlu0 %v779, 64
    %v782 = vpop.permute.xlu0 %781
    %v784 = vadd.f32 %v778, %v782
    %v785 = vtanh.pop %v784
    %v786 = vmul.f32 %v777, %v785
    %788 = vrot.lane.b32.xlu0 %v786, 64
    %v789 = vpop.permute.xlu0 %788
    %791 = vst.msk [vmem:[#allocation2 + $0x20] sm:$0xff] %vm470, %v789
    %792 = vrot.lane.b32.xlu0 %v786, 32
    %v793 = vpop.permute.xlu0 %792
    %795 = vst.msk [vmem:[#allocation3 + $0x18] sm:$0xff] %vm470, %v793
    %v796 = vld [vmem:[#allocation4 + $0xa0] sm:$0xff]
    %v797 = vld [vmem:[#allocation4 + $0xa8] sm:$0xff]
    %v798 = vpack.c.bf16 %v786, %v786
    %800 = vrot.lane.b32.xlu0 %v798, 64
    %v801 = vpop.permute.xlu0 %800
    %v803 = vsel %vm378, %v801, 0
    %805 = vmatprep.subr.bf16.mxu0 %v363
    %806 = vmatpush1.bf16.msra.mxu0 %v362
    %807 = vmatprep.subr.bf16.mxu0 %v365
    %808 = vmatpush1.bf16.msra.mxu0 %v364
    %809 = vmatprep.subr.bf16.mxu0 %v367
    %810 = vmatpush1.bf16.msra.mxu0 %v366
    %811 = vmatprep.subr.bf16.mxu0 %v369
    %812 = vmatpush1.bf16.msra.mxu0 %v368
    %813 = vmatprep.subr.bf16.mxu0 0
    %814 = vmatpush1.bf16.msra.mxu0 0
    %815 = vmatprep.subr.bf16.mxu0 0
    %816 = vmatpush1.bf16.msra.mxu0 0
    %817 = vmatprep.subr.bf16.mxu0 0
    %818 = vmatpush1.bf16.msra.mxu0 0
    %819 = vmatprep.subr.bf16.mxu0 0
    %820 = vmatpush1.bf16.msra.mxu0 0
    %821 = vmatprep.subr.bf16.mxu0 0
    %822 = vmatpush1.bf16.msra.mxu0 0
    %823 = vmatprep.subr.bf16.mxu0 0
    %824 = vmatpush1.bf16.msra.mxu0 0
    %825 = vmatprep.subr.bf16.mxu0 0
    %826 = vmatpush1.bf16.msra.mxu0 0
    %827 = vmatprep.subr.bf16.mxu0 0
    %828 = vmatpush1.bf16.msra.mxu0 0
    %829 = vmatprep.subr.bf16.mxu0 0
    %830 = vmatpush1.bf16.msra.mxu0 0
    %831 = vmatprep.subr.bf16.mxu0 0
    %832 = vmatpush1.bf16.msra.mxu0 0
    %833 = vmatprep.subr.bf16.mxu0 0
    %834 = vmatpush1.bf16.msra.mxu0 0
    %835 = vmatprep.subr.bf16.mxu0 0
    %836 = vmatpush1.bf16.msra.mxu0 0
    %837 = vmatprep.mubr.bf16.mxu0 0
    %838 = vmatmul.mubr.bf16.gmra.mrb[0].mxu0 %v803
    %v839 = vpop.f32.mrb[0].mxu0
    %v840 = vadd.f32 0.0, %v839
    %v841 = vpop.f32.mrb[0].mxu0
    %v842 = vadd.f32 0.0, %v841
    %v843 = vpop.f32.mrb[0].mxu0
    %v844 = vpop.f32.mrb[0].mxu0
    %845 = vdwg.mxu0
    %v846 = vadd.f32 %v796, %v840
    %v847 = vadd.f32 %v797, %v842
    %v848 = vld [vmem:[#allocation4 + $0x50] sm:$0xff]
    %v849 = vld [vmem:[#allocation4 + $0x58] sm:$0xff]
    %v850 = vadd.f32 %v846, %v848
    %v851 = vadd.f32 %v847, %v849
    %v852 = vtanh.pop %v850
    %v853 = vtanh.pop %v851
    %v854 = vmul.f32 %v852, %v435
    %v855 = vmul.f32 %v853, %v439
    %v856 = vadd.f32 %v854, %v448
    %v857 = vadd.f32 %v855, %v452
    %v858 = vmul.f32 %v856, %v784
    %v859 = vmul.f32 %v856, %v857
    %861 = vrot.lane.b32.xlu0 %v859, 64
    %v862 = vpop.permute.xlu0 %861
    %v864 = vadd.f32 %v858, %v862
    %v865 = vtanh.pop %v864
    %v866 = vmul.f32 %v857, %v865
    %868 = vrot.lane.b32.xlu0 %v866, 64
    %v869 = vpop.permute.xlu0 %868
    %871 = vst.msk [vmem:[#allocation2 + $0x28] sm:$0xff] %vm470, %v869
    %872 = vrot.lane.b32.xlu0 %v866, 32
    %v873 = vpop.permute.xlu0 %872
    %875 = vst.msk [vmem:[#allocation3 + $0x10] sm:$0xff] %vm470, %v873
    %v876 = vld [vmem:[#allocation4 + $0xc0] sm:$0xff]
    %v877 = vld [vmem:[#allocation4 + $0xc8] sm:$0xff]
    %v878 = vpack.c.bf16 %v866, %v866
    %880 = vrot.lane.b32.xlu0 %v878, 64
    %v881 = vpop.permute.xlu0 %880
    %v883 = vsel %vm378, %v881, 0
    %885 = vmatprep.subr.bf16.mxu0 %v363
    %886 = vmatpush1.bf16.msra.mxu0 %v362
    %887 = vmatprep.subr.bf16.mxu0 %v365
    %888 = vmatpush1.bf16.msra.mxu0 %v364
    %889 = vmatprep.subr.bf16.mxu0 %v367
    %890 = vmatpush1.bf16.msra.mxu0 %v366
    %891 = vmatprep.subr.bf16.mxu0 %v369
    %892 = vmatpush1.bf16.msra.mxu0 %v368
    %893 = vmatprep.subr.bf16.mxu0 0
    %894 = vmatpush1.bf16.msra.mxu0 0
    %895 = vmatprep.subr.bf16.mxu0 0
    %896 = vmatpush1.bf16.msra.mxu0 0
    %897 = vmatprep.subr.bf16.mxu0 0
    %898 = vmatpush1.bf16.msra.mxu0 0
    %899 = vmatprep.subr.bf16.mxu0 0
    %900 = vmatpush1.bf16.msra.mxu0 0
    %901 = vmatprep.subr.bf16.mxu0 0
    %902 = vmatpush1.bf16.msra.mxu0 0
    %903 = vmatprep.subr.bf16.mxu0 0
    %904 = vmatpush1.bf16.msra.mxu0 0
    %905 = vmatprep.subr.bf16.mxu0 0
    %906 = vmatpush1.bf16.msra.mxu0 0
    %907 = vmatprep.subr.bf16.mxu0 0
    %908 = vmatpush1.bf16.msra.mxu0 0
    %909 = vmatprep.subr.bf16.mxu0 0
    %910 = vmatpush1.bf16.msra.mxu0 0
    %911 = vmatprep.subr.bf16.mxu0 0
    %912 = vmatpush1.bf16.msra.mxu0 0
    %913 = vmatprep.subr.bf16.mxu0 0
    %914 = vmatpush1.bf16.msra.mxu0 0
    %915 = vmatprep.subr.bf16.mxu0 0
    %916 = vmatpush1.bf16.msra.mxu0 0
    %917 = vmatprep.mubr.bf16.mxu0 0
    %918 = vmatmul.mubr.bf16.gmra.mrb[0].mxu0 %v883
    %v919 = vpop.f32.mrb[0].mxu0
    %v920 = vadd.f32 0.0, %v919
    %v921 = vpop.f32.mrb[0].mxu0
    %v922 = vadd.f32 0.0, %v921
    %v923 = vpop.f32.mrb[0].mxu0
    %v924 = vpop.f32.mrb[0].mxu0
    %925 = vdwg.mxu0
    %v926 = vadd.f32 %v876, %v920
    %v927 = vadd.f32 %v877, %v922
    %v928 = vld [vmem:[#allocation4 + $0x30] sm:$0xff]
    %v929 = vld [vmem:[#allocation4 + $0x38] sm:$0xff]
    %v930 = vadd.f32 %v926, %v928
    %v931 = vadd.f32 %v927, %v929
    %v932 = vtanh.pop %v930
    %v933 = vtanh.pop %v931
    %v934 = vmul.f32 %v932, %v435
    %v935 = vmul.f32 %v933, %v439
    %v936 = vadd.f32 %v934, %v448
    %v937 = vadd.f32 %v935, %v452
    %v938 = vmul.f32 %v936, %v864
    %v939 = vmul.f32 %v936, %v937
    %941 = vrot.lane.b32.xlu0 %v939, 64
    %v942 = vpop.permute.xlu0 %941
    %v944 = vadd.f32 %v938, %v942
    %v945 = vtanh.pop %v944
    %v946 = vmul.f32 %v937, %v945
    %948 = vrot.lane.b32.xlu0 %v946, 64
    %v949 = vpop.permute.xlu0 %948
    %951 = vst.msk [vmem:[#allocation2 + $0x30] sm:$0xff] %vm470, %v949
    %952 = vrot.lane.b32.xlu0 %v946, 32
    %v953 = vpop.permute.xlu0 %952
    %955 = vst.msk [vmem:[#allocation3 + $0x8] sm:$0xff] %vm470, %v953
    %v956 = vld [vmem:[#allocation4 + $0xe0] sm:$0xff]
    %v957 = vld [vmem:[#allocation4 + $0xe8] sm:$0xff]
    %v958 = vpack.c.bf16 %v946, %v946
    %960 = vrot.lane.b32.xlu0 %v958, 64
    %v961 = vpop.permute.xlu0 %960
    %v963 = vsel %vm378, %v961, 0
    %965 = vmatprep.subr.bf16.mxu0 %v363
    %966 = vmatpush1.bf16.msra.mxu0 %v362
    %967 = vmatprep.subr.bf16.mxu0 %v365
    %968 = vmatpush1.bf16.msra.mxu0 %v364
    %969 = vmatprep.subr.bf16.mxu0 %v367
    %970 = vmatpush1.bf16.msra.mxu0 %v366
    %971 = vmatprep.subr.bf16.mxu0 %v369
    %972 = vmatpush1.bf16.msra.mxu0 %v368
    %973 = vmatprep.subr.bf16.mxu0 0
    %974 = vmatpush1.bf16.msra.mxu0 0
    %975 = vmatprep.subr.bf16.mxu0 0
    %976 = vmatpush1.bf16.msra.mxu0 0
    %977 = vmatprep.subr.bf16.mxu0 0
    %978 = vmatpush1.bf16.msra.mxu0 0
    %979 = vmatprep.subr.bf16.mxu0 0
    %980 = vmatpush1.bf16.msra.mxu0 0
    %981 = vmatprep.subr.bf16.mxu0 0
    %982 = vmatpush1.bf16.msra.mxu0 0
    %983 = vmatprep.subr.bf16.mxu0 0
    %984 = vmatpush1.bf16.msra.mxu0 0
    %985 = vmatprep.subr.bf16.mxu0 0
    %986 = vmatpush1.bf16.msra.mxu0 0
    %987 = vmatprep.subr.bf16.mxu0 0
    %988 = vmatpush1.bf16.msra.mxu0 0
    %989 = vmatprep.subr.bf16.mxu0 0
    %990 = vmatpush1.bf16.msra.mxu0 0
    %991 = vmatprep.subr.bf16.mxu0 0
    %992 = vmatpush1.bf16.msra.mxu0 0
    %993 = vmatprep.subr.bf16.mxu0 0
    %994 = vmatpush1.bf16.msra.mxu0 0
    %995 = vmatprep.subr.bf16.mxu0 0
    %996 = vmatpush1.bf16.msra.mxu0 0
    %997 = vmatprep.mubr.bf16.mxu0 0
    %998 = vmatmul.mubr.bf16.gmra.mrb[0].mxu0 %v963
    %v999 = vpop.f32.mrb[0].mxu0
    %v1000 = vadd.f32 0.0, %v999
    %v1001 = vpop.f32.mrb[0].mxu0
    %v1002 = vadd.f32 0.0, %v1001
    %v1003 = vpop.f32.mrb[0].mxu0
    %v1004 = vpop.f32.mrb[0].mxu0
    %1005 = vdwg.mxu0
    %v1006 = vadd.f32 %v956, %v1000
    %v1007 = vadd.f32 %v957, %v1002
    %v1008 = vld [vmem:[#allocation4 + $0x10] sm:$0xff]
    %v1009 = vld [vmem:[#allocation4 + $0x18] sm:$0xff]
    %v1010 = vadd.f32 %v1006, %v1008
    %v1011 = vadd.f32 %v1007, %v1009
    %v1012 = vtanh.pop %v1010
    %v1013 = vtanh.pop %v1011
    %v1014 = vmul.f32 %v1012, %v435
    %v1015 = vmul.f32 %v1013, %v439
    %v1016 = vadd.f32 %v1014, %v448
    %v1017 = vadd.f32 %v1015, %v452
    %v1018 = vmul.f32 %v1016, %v944
    %v1019 = vmul.f32 %v1016, %v1017
    %1021 = vrot.lane.b32.xlu0 %v1019, 64
    %v1022 = vpop.permute.xlu0 %1021
    %v1024 = vadd.f32 %v1018, %v1022
    %v1025 = vtanh.pop %v1024
    %v1026 = vmul.f32 %v1017, %v1025
    %1028 = vrot.lane.b32.xlu0 %v1026, 64
    %v1029 = vpop.permute.xlu0 %1028
    %1031 = vst.msk [vmem:[#allocation2 + $0x38] sm:$0xff] %vm470, %v1029
    %1032 = vrot.lane.b32.xlu0 %v1026, 32
    %v1033 = vpop.permute.xlu0 %1032
    %1035 = vst.msk [vmem:[#allocation3] sm:$0xff] %vm470, %v1033
    %v1036 = vld [vmem:[#allocation2] sm:$0xff]
    %v1037 = vld [vmem:[#allocation2 + $0x8] sm:$0xff]
    %v1038 = vld [vmem:[#allocation2 + $0x10] sm:$0xff]
    %v1039 = vld [vmem:[#allocation2 + $0x18] sm:$0xff]
    %v1040 = vld [vmem:[#allocation2 + $0x20] sm:$0xff]
    %v1041 = vld [vmem:[#allocation2 + $0x28] sm:$0xff]
    %v1042 = vld [vmem:[#allocation2 + $0x30] sm:$0xff]
    %v1043 = vld [vmem:[#allocation2 + $0x38] sm:$0xff]
    %v1044 = vld [vmem:[#allocation3] sm:$0xff]
    %v1045 = vld [vmem:[#allocation3 + $0x8] sm:$0xff]
    %v1046 = vld [vmem:[#allocation3 + $0x10] sm:$0xff]
    %v1047 = vld [vmem:[#allocation3 + $0x18] sm:$0xff]
    %v1048 = vld [vmem:[#allocation3 + $0x20] sm:$0xff]
    %v1049 = vld [vmem:[#allocation3 + $0x28] sm:$0xff]
    %v1050 = vld [vmem:[#allocation3 + $0x30] sm:$0xff]
    %v1051 = vld [vmem:[#allocation3 + $0x38] sm:$0xff]
    %1060 = vrot.lane.b32.xlu0 %v1044, 32
    %v1061 = vpop.permute.xlu0 %1060
    %1062 = vrot.lane.b32.xlu0 %v1045, 32
    %v1063 = vpop.permute.xlu0 %1062
    %1064 = vrot.lane.b32.xlu0 %v1046, 32
    %v1065 = vpop.permute.xlu0 %1064
    %1066 = vrot.lane.b32.xlu0 %v1047, 32
    %v1067 = vpop.permute.xlu0 %1066
    %1068 = vrot.lane.b32.xlu0 %v1048, 32
    %v1069 = vpop.permute.xlu0 %1068
    %1070 = vrot.lane.b32.xlu0 %v1049, 32
    %v1071 = vpop.permute.xlu0 %1070
    %1072 = vrot.lane.b32.xlu0 %v1050, 32
    %v1073 = vpop.permute.xlu0 %1072
    %1074 = vrot.lane.b32.xlu0 %v1051, 32
    %v1075 = vpop.permute.xlu0 %1074
    %v1084 = vsel %vm470, %v1036, %v1061
    %v1085 = vsel %vm470, %v1037, %v1063
    %v1086 = vsel %vm470, %v1038, %v1065
    %v1087 = vsel %vm470, %v1039, %v1067
    %v1088 = vsel %vm470, %v1040, %v1069
    %v1089 = vsel %vm470, %v1041, %v1071
    %v1090 = vsel %vm470, %v1042, %v1073
    %v1091 = vsel %vm470, %v1043, %v1075
    %v1092 = vpack.c.bf16 %v1085, %v1084
    %v1093 = vpack.c.bf16 %v1087, %v1086
    %v1094 = vpack.c.bf16 %v1089, %v1088
    %v1095 = vpack.c.bf16 %v1091, %v1090
    %v1096 = vld [vmem:[%s4] sm:$0xff]
    %v1097 = vld [vmem:[%s4 + $0x8] sm:$0xff]
    %v1098 = vld [vmem:[%s4 + $0x10] sm:$0xff]
    %v1099 = vld [vmem:[%s4 + $0x18] sm:$0xff]
    %v1100 = vld [vmem:[%s4 + $0x20] sm:$0xff]
    %v1101 = vld [vmem:[%s4 + $0x28] sm:$0xff]
    %v1102 = vld [vmem:[%s4 + $0x30] sm:$0xff]
    %v1103 = vld [vmem:[%s4 + $0x38] sm:$0xff]
    %v1104 = vld [vmem:[%s4 + $0x40] sm:$0xff]
    %v1105 = vld [vmem:[%s4 + $0x48] sm:$0xff]
    %v1106 = vld [vmem:[%s4 + $0x50] sm:$0xff]
    %v1107 = vld [vmem:[%s4 + $0x58] sm:$0xff]
    %v1108 = vld [vmem:[%s4 + $0x60] sm:$0xff]
    %v1109 = vld [vmem:[%s4 + $0x68] sm:$0xff]
    %v1110 = vld [vmem:[%s4 + $0x70] sm:$0xff]
    %v1111 = vld [vmem:[%s4 + $0x78] sm:$0xff]
    %v1112 = vld [vmem:[#allocation5] sm:$0xff]
    %v1113 = vld [vmem:[#allocation5 + $0x8] sm:$0xff]
    %v1114 = vld [vmem:[#allocation5 + $0x10] sm:$0xff]
    %v1115 = vld [vmem:[#allocation5 + $0x18] sm:$0xff]
    %v1116 = vld [vmem:[#allocation5 + $0x20] sm:$0xff]
    %v1117 = vld [vmem:[#allocation5 + $0x28] sm:$0xff]
    %v1118 = vld [vmem:[#allocation5 + $0x30] sm:$0xff]
    %v1119 = vld [vmem:[#allocation5 + $0x38] sm:$0xff]
    %v1120 = vld [vmem:[%s6] sm:$0x3]
    %v1122 = vlaneseq
    %v1123 = vshrl.u32 %v1122, 7
    %v1124 = vsub.s32 0, %v1123
    %v1125 = vrot.slane %v1120, %v1124
    %v1126 = vlaneseq
    %v1127 = vshrl.u32 %v1126, 7
    %v1128 = vsub.s32 1, %v1127
    %v1129 = vrot.slane %v1120, %v1128
    %v1140 = vunpack.c.l.b16 %v1096
    %v1141 = vunpack.c.h.b16 %v1096
    %v1142 = vunpack.c.l.b16 %v1098
    %v1143 = vunpack.c.h.b16 %v1098
    %v1144 = vunpack.c.l.b16 %v1100
    %v1145 = vunpack.c.h.b16 %v1100
    %v1146 = vunpack.c.l.b16 %v1102
    %v1147 = vunpack.c.h.b16 %v1102
    %v1148 = vunpack.c.l.b16 %v1104
    %v1149 = vunpack.c.h.b16 %v1104
    %v1150 = vunpack.c.l.b16 %v1106
    %v1151 = vunpack.c.h.b16 %v1106
    %v1152 = vunpack.c.l.b16 %v1108
    %v1153 = vunpack.c.h.b16 %v1108
    %v1154 = vunpack.c.l.b16 %v1110
    %v1155 = vunpack.c.h.b16 %v1110
    %v1156 = vpack.c.b16 %v1142, %v1140
    %v1157 = vpack.c.b16 %v1143, %v1141
    %v1158 = vpack.c.b16 %v1146, %v1144
    %v1159 = vpack.c.b16 %v1147, %v1145
    %v1160 = vpack.c.b16 %v1150, %v1148
    %v1161 = vpack.c.b16 %v1151, %v1149
    %v1162 = vpack.c.b16 %v1154, %v1152
    %v1163 = vpack.c.b16 %v1155, %v1153
    %v1173 = vsel %vm378, %v1092, 0
    %v1176 = vsel %vm378, %v1093, 0
    %v1179 = vsel %vm378, %v1094, 0
    %v1182 = vsel %vm378, %v1095, 0
    %1184 = vmatprep.subr.bf16.mxu0 %v1157
    %1185 = vmatpush1.bf16.msra.mxu0 %v1156
    %1186 = vmatprep.subr.bf16.mxu0 %v1159
    %1187 = vmatpush1.bf16.msra.mxu0 %v1158
    %1188 = vmatprep.subr.bf16.mxu0 %v1161
    %1189 = vmatpush1.bf16.msra.mxu0 %v1160
    %1190 = vmatprep.subr.bf16.mxu0 %v1163
    %1191 = vmatpush1.bf16.msra.mxu0 %v1162
    %1192 = vmatprep.subr.bf16.mxu0 0
    %1193 = vmatpush1.bf16.msra.mxu0 0
    %1194 = vmatprep.subr.bf16.mxu0 0
    %1195 = vmatpush1.bf16.msra.mxu0 0
    %1196 = vmatprep.subr.bf16.mxu0 0
    %1197 = vmatpush1.bf16.msra.mxu0 0
    %1198 = vmatprep.subr.bf16.mxu0 0
    %1199 = vmatpush1.bf16.msra.mxu0 0
    %1200 = vmatprep.subr.bf16.mxu0 0
    %1201 = vmatpush1.bf16.msra.mxu0 0
    %1202 = vmatprep.subr.bf16.mxu0 0
    %1203 = vmatpush1.bf16.msra.mxu0 0
    %1204 = vmatprep.subr.bf16.mxu0 0
    %1205 = vmatpush1.bf16.msra.mxu0 0
    %1206 = vmatprep.subr.bf16.mxu0 0
    %1207 = vmatpush1.bf16.msra.mxu0 0
    %1208 = vmatprep.subr.bf16.mxu0 0
    %1209 = vmatpush1.bf16.msra.mxu0 0
    %1210 = vmatprep.subr.bf16.mxu0 0
    %1211 = vmatpush1.bf16.msra.mxu0 0
    %1212 = vmatprep.subr.bf16.mxu0 0
    %1213 = vmatpush1.bf16.msra.mxu0 0
    %1214 = vmatprep.subr.bf16.mxu0 0
    %1215 = vmatpush1.bf16.msra.mxu0 0
    %1216 = vmatprep.mubr.bf16.mxu0 0
    %1217 = vmatmul.mubr.bf16.gmra.mrb[0].mxu0 %v1173
    %v1218 = vpop.f32.mrb[0].mxu0
    %v1219 = vadd.f32 %v1125, %v1218
    %v1220 = vpop.f32.mrb[0].mxu0
    %v1221 = vadd.f32 %v1129, %v1220
    %v1222 = vpop.f32.mrb[0].mxu0
    %v1223 = vadd.f32 %v1125, %v1222
    %v1224 = vpop.f32.mrb[0].mxu0
    %v1225 = vadd.f32 %v1129, %v1224
    %1226 = vmatprep.mubr.bf16.mxu0 0
    %1227 = vmatmul.mubr.bf16.gmra.mrb[0].mxu0 %v1176
    %v1228 = vpop.f32.mrb[0].mxu0
    %v1229 = vadd.f32 %v1125, %v1228
    %v1230 = vpop.f32.mrb[0].mxu0
    %v1231 = vadd.f32 %v1129, %v1230
    %v1232 = vpop.f32.mrb[0].mxu0
    %v1233 = vadd.f32 %v1125, %v1232
    %v1234 = vpop.f32.mrb[0].mxu0
    %v1235 = vadd.f32 %v1129, %v1234
    %1236 = vmatprep.mubr.bf16.mxu0 0
    %1237 = vmatmul.mubr.bf16.gmra.mrb[0].mxu0 %v1179
    %v1238 = vpop.f32.mrb[0].mxu0
    %v1239 = vadd.f32 %v1125, %v1238
    %v1240 = vpop.f32.mrb[0].mxu0
    %v1241 = vadd.f32 %v1129, %v1240
    %v1242 = vpop.f32.mrb[0].mxu0
    %v1243 = vadd.f32 %v1125, %v1242
    %v1244 = vpop.f32.mrb[0].mxu0
    %v1245 = vadd.f32 %v1129, %v1244
    %1246 = vmatprep.mubr.bf16.mxu0 0
    %1247 = vmatmul.mubr.bf16.gmra.mrb[0].mxu0 %v1182
    %v1248 = vpop.f32.mrb[0].mxu0
    %v1249 = vadd.f32 %v1125, %v1248
    %v1250 = vpop.f32.mrb[0].mxu0
    %v1251 = vadd.f32 %v1129, %v1250
    %v1252 = vpop.f32.mrb[0].mxu0
    %v1253 = vadd.f32 %v1125, %v1252
    %v1254 = vpop.f32.mrb[0].mxu0
    %v1255 = vadd.f32 %v1129, %v1254
    %1256 = vdwg.mxu0
    %1257 = vst [vmem:[#allocation4] sm:$0xff] %v1219
    %1258 = vst [vmem:[#allocation4 + $0x8] sm:$0xff] %v1221
    %1259 = vst [vmem:[#allocation4 + $0x20] sm:$0xff] %v1223
    %1260 = vst [vmem:[#allocation4 + $0x28] sm:$0xff] %v1225
    %1261 = vst [vmem:[#allocation4 + $0x40] sm:$0xff] %v1229
    %1262 = vst [vmem:[#allocation4 + $0x48] sm:$0xff] %v1231
    %1263 = vst [vmem:[#allocation4 + $0x60] sm:$0xff] %v1233
    %1264 = vst [vmem:[#allocation4 + $0x68] sm:$0xff] %v1235
    %1265 = vst [vmem:[#allocation4 + $0x80] sm:$0xff] %v1239
    %1266 = vst [vmem:[#allocation4 + $0x88] sm:$0xff] %v1241
    %1267 = vst [vmem:[#allocation4 + $0xa0] sm:$0xff] %v1243
    %1268 = vst [vmem:[#allocation4 + $0xa8] sm:$0xff] %v1245
    %1269 = vst [vmem:[#allocation4 + $0xc0] sm:$0xff] %v1249
    %1270 = vst [vmem:[#allocation4 + $0xc8] sm:$0xff] %v1251
    %1271 = vst [vmem:[#allocation4 + $0xe0] sm:$0xff] %v1253
    %1272 = vst [vmem:[#allocation4 + $0xe8] sm:$0xff] %v1255
    %v1273 = vld [vmem:[#allocation2 + $0x38] sm:$0xff]
    %v1274 = vld [vmem:[#allocation3 + $0x38] sm:$0xff]
    %1276 = vrot.lane.b32.xlu0 %v1274, 32
    %v1277 = vpop.permute.xlu0 %1276
    %v1279 = vsel %vm470, %v1273, %v1277
    %v1280 = vpack.c.bf16 %v1279, %v1279
    %v1289 = vunpack.c.l.b16 %v1097
    %v1290 = vunpack.c.h.b16 %v1097
    %v1291 = vunpack.c.l.b16 %v1099
    %v1292 = vunpack.c.h.b16 %v1099
    %v1293 = vunpack.c.l.b16 %v1101
    %v1294 = vunpack.c.h.b16 %v1101
    %v1295 = vunpack.c.l.b16 %v1103
    %v1296 = vunpack.c.h.b16 %v1103
    %v1297 = vunpack.c.l.b16 %v1105
    %v1298 = vunpack.c.h.b16 %v1105
    %v1299 = vunpack.c.l.b16 %v1107
    %v1300 = vunpack.c.h.b16 %v1107
    %v1301 = vunpack.c.l.b16 %v1109
    %v1302 = vunpack.c.h.b16 %v1109
    %v1303 = vunpack.c.l.b16 %v1111
    %v1304 = vunpack.c.h.b16 %v1111
    %v1305 = vpack.c.b16 %v1291, %v1289
    %v1306 = vpack.c.b16 %v1292, %v1290
    %v1307 = vpack.c.b16 %v1295, %v1293
    %v1308 = vpack.c.b16 %v1296, %v1294
    %v1309 = vpack.c.b16 %v1299, %v1297
    %v1310 = vpack.c.b16 %v1300, %v1298
    %v1311 = vpack.c.b16 %v1303, %v1301
    %v1312 = vpack.c.b16 %v1304, %v1302
    %v1322 = vsel %vm378, %v1280, 0
    %1324 = vmatprep.subr.bf16.mxu0 %v1306
    %1325 = vmatpush1.bf16.msra.mxu0 %v1305
    %1326 = vmatprep.subr.bf16.mxu0 %v1308
    %1327 = vmatpush1.bf16.msra.mxu0 %v1307
    %1328 = vmatprep.subr.bf16.mxu0 %v1310
    %1329 = vmatpush1.bf16.msra.mxu0 %v1309
    %1330 = vmatprep.subr.bf16.mxu0 %v1312
    %1331 = vmatpush1.bf16.msra.mxu0 %v1311
    %1332 = vmatprep.subr.bf16.mxu0 0
    %1333 = vmatpush1.bf16.msra.mxu0 0
    %1334 = vmatprep.subr.bf16.mxu0 0
    %1335 = vmatpush1.bf16.msra.mxu0 0
    %1336 = vmatprep.subr.bf16.mxu0 0
    %1337 = vmatpush1.bf16.msra.mxu0 0
    %1338 = vmatprep.subr.bf16.mxu0 0
    %1339 = vmatpush1.bf16.msra.mxu0 0
    %1340 = vmatprep.subr.bf16.mxu0 0
    %1341 = vmatpush1.bf16.msra.mxu0 0
    %1342 = vmatprep.subr.bf16.mxu0 0
    %1343 = vmatpush1.bf16.msra.mxu0 0
    %1344 = vmatprep.subr.bf16.mxu0 0
    %1345 = vmatpush1.bf16.msra.mxu0 0
    %1346 = vmatprep.subr.bf16.mxu0 0
    %1347 = vmatpush1.bf16.msra.mxu0 0
    %1348 = vmatprep.subr.bf16.mxu0 0
    %1349 = vmatpush1.bf16.msra.mxu0 0
    %1350 = vmatprep.subr.bf16.mxu0 0
    %1351 = vmatpush1.bf16.msra.mxu0 0
    %1352 = vmatprep.subr.bf16.mxu0 0
    %1353 = vmatpush1.bf16.msra.mxu0 0
    %1354 = vmatprep.subr.bf16.mxu0 0
    %1355 = vmatpush1.bf16.msra.mxu0 0
    %1356 = vmatprep.mubr.bf16.mxu0 0
    %1357 = vmatmul.mubr.bf16.gmra.mrb[0].mxu0 %v1322
    %v1358 = vpop.f32.mrb[0].mxu0
    %v1359 = vadd.f32 0.0, %v1358
    %v1360 = vpop.f32.mrb[0].mxu0
    %v1361 = vadd.f32 0.0, %v1360
    %v1362 = vpop.f32.mrb[0].mxu0
    %v1363 = vpop.f32.mrb[0].mxu0
    %1364 = vdwg.mxu0
    %v1365 = vld [vmem:[#allocation4] sm:$0xff]
    %v1366 = vld [vmem:[#allocation4 + $0x8] sm:$0xff]
    %v1375 = vunpack.c.l.b16 %v1112
    %v1376 = vunpack.c.h.b16 %v1112
    %v1377 = vunpack.c.l.b16 %v1113
    %v1378 = vunpack.c.h.b16 %v1113
    %v1379 = vunpack.c.l.b16 %v1114
    %v1380 = vunpack.c.h.b16 %v1114
    %v1381 = vunpack.c.l.b16 %v1115
    %v1382 = vunpack.c.h.b16 %v1115
    %v1383 = vunpack.c.l.b16 %v1116
    %v1384 = vunpack.c.h.b16 %v1116
    %v1385 = vunpack.c.l.b16 %v1117
    %v1386 = vunpack.c.h.b16 %v1117
    %v1387 = vunpack.c.l.b16 %v1118
    %v1388 = vunpack.c.h.b16 %v1118
    %v1389 = vunpack.c.l.b16 %v1119
    %v1390 = vunpack.c.h.b16 %v1119
    %v1391 = vpack.c.b16 %v1377, %v1375
    %v1392 = vpack.c.b16 %v1378, %v1376
    %v1393 = vpack.c.b16 %v1381, %v1379
    %v1394 = vpack.c.b16 %v1382, %v1380
    %v1395 = vpack.c.b16 %v1385, %v1383
    %v1396 = vpack.c.b16 %v1386, %v1384
    %v1397 = vpack.c.b16 %v1389, %v1387
    %v1398 = vpack.c.b16 %v1390, %v1388
    %1407 = vmatprep.subr.bf16.mxu0 %v1392
    %1408 = vmatpush1.bf16.msra.mxu0 %v1391
    %1409 = vmatprep.subr.bf16.mxu0 %v1394
    %1410 = vmatpush1.bf16.msra.mxu0 %v1393
    %1411 = vmatprep.subr.bf16.mxu0 %v1396
    %1412 = vmatpush1.bf16.msra.mxu0 %v1395
    %1413 = vmatprep.subr.bf16.mxu0 %v1398
    %1414 = vmatpush1.bf16.msra.mxu0 %v1397
    %1415 = vmatprep.subr.bf16.mxu0 0
    %1416 = vmatpush1.bf16.msra.mxu0 0
    %1417 = vmatprep.subr.bf16.mxu0 0
    %1418 = vmatpush1.bf16.msra.mxu0 0
    %1419 = vmatprep.subr.bf16.mxu0 0
    %1420 = vmatpush1.bf16.msra.mxu0 0
    %1421 = vmatprep.subr.bf16.mxu0 0
    %1422 = vmatpush1.bf16.msra.mxu0 0
    %1423 = vmatprep.subr.bf16.mxu0 0
    %1424 = vmatpush1.bf16.msra.mxu0 0
    %1425 = vmatprep.subr.bf16.mxu0 0
    %1426 = vmatpush1.bf16.msra.mxu0 0
    %1427 = vmatprep.subr.bf16.mxu0 0
    %1428 = vmatpush1.bf16.msra.mxu0 0
    %1429 = vmatprep.subr.bf16.mxu0 0
    %1430 = vmatpush1.bf16.msra.mxu0 0
    %1431 = vmatprep.subr.bf16.mxu0 0
    %1432 = vmatpush1.bf16.msra.mxu0 0
    %1433 = vmatprep.subr.bf16.mxu0 0
    %1434 = vmatpush1.bf16.msra.mxu0 0
    %1435 = vmatprep.subr.bf16.mxu0 0
    %1436 = vmatpush1.bf16.msra.mxu0 0
    %1437 = vmatprep.subr.bf16.mxu0 0
    %1438 = vmatpush1.bf16.msra.mxu0 0
    %1439 = vmatprep.mubr.bf16.mxu0 0
    %1440 = vmatmul.mubr.bf16.gmra.mrb[0].mxu0 %v380
    %v1441 = vpop.f32.mrb[0].mxu0
    %v1442 = vadd.f32 0.0, %v1441
    %v1443 = vpop.f32.mrb[0].mxu0
    %v1444 = vadd.f32 0.0, %v1443
    %v1445 = vpop.f32.mrb[0].mxu0
    %v1446 = vpop.f32.mrb[0].mxu0
    %1447 = vdwg.mxu0
    %v1448 = vadd.f32 %v1365, %v1442
    %v1449 = vadd.f32 %v1366, %v1444
    %v1450 = vadd.f32 %v1448, %v1359
    %v1451 = vadd.f32 %v1449, %v1361
    %v1452 = vtanh.pop %v1450
    %v1453 = vtanh.pop %v1451
    %v1454 = vmul.f32 %v1452, %v435
    %v1455 = vmul.f32 %v1453, %v439
    %v1456 = vadd.f32 %v1454, %v448
    %v1457 = vadd.f32 %v1455, %v452
    %v1458 = vmul.f32 %v1456, 0.0
    %v1459 = vmul.f32 %v1456, %v1457
    %1461 = vrot.lane.b32.xlu0 %v1459, 64
    %v1462 = vpop.permute.xlu0 %1461
    %v1464 = vadd.f32 %v1458, %v1462
    %v1465 = vtanh.pop %v1464
    %v1466 = vmul.f32 %v1457, %v1465
    %v1467 = vld [vmem:[#allocation4 + $0x20] sm:$0xff]
    %v1468 = vld [vmem:[#allocation4 + $0x28] sm:$0xff]
    %v1469 = vpack.c.bf16 %v1466, %v1466
    %1471 = vrot.lane.b32.xlu0 %v1469, 64
    %v1472 = vpop.permute.xlu0 %1471
    %v1474 = vsel %vm378, %v1472, 0
    %1476 = vmatprep.subr.bf16.mxu0 %v1392
    %1477 = vmatpush1.bf16.msra.mxu0 %v1391
    %1478 = vmatprep.subr.bf16.mxu0 %v1394
    %1479 = vmatpush1.bf16.msra.mxu0 %v1393
    %1480 = vmatprep.subr.bf16.mxu0 %v1396
    %1481 = vmatpush1.bf16.msra.mxu0 %v1395
    %1482 = vmatprep.subr.bf16.mxu0 %v1398
    %1483 = vmatpush1.bf16.msra.mxu0 %v1397
    %1484 = vmatprep.subr.bf16.mxu0 0
    %1485 = vmatpush1.bf16.msra.mxu0 0
    %1486 = vmatprep.subr.bf16.mxu0 0
    %1487 = vmatpush1.bf16.msra.mxu0 0
    %1488 = vmatprep.subr.bf16.mxu0 0
    %1489 = vmatpush1.bf16.msra.mxu0 0
    %1490 = vmatprep.subr.bf16.mxu0 0
    %1491 = vmatpush1.bf16.msra.mxu0 0
    %1492 = vmatprep.subr.bf16.mxu0 0
    %1493 = vmatpush1.bf16.msra.mxu0 0
    %1494 = vmatprep.subr.bf16.mxu0 0
    %1495 = vmatpush1.bf16.msra.mxu0 0
    %1496 = vmatprep.subr.bf16.mxu0 0
    %1497 = vmatpush1.bf16.msra.mxu0 0
    %1498 = vmatprep.subr.bf16.mxu0 0
    %1499 = vmatpush1.bf16.msra.mxu0 0
    %1500 = vmatprep.subr.bf16.mxu0 0
    %1501 = vmatpush1.bf16.msra.mxu0 0
    %1502 = vmatprep.subr.bf16.mxu0 0
    %1503 = vmatpush1.bf16.msra.mxu0 0
    %1504 = vmatprep.subr.bf16.mxu0 0
    %1505 = vmatpush1.bf16.msra.mxu0 0
    %1506 = vmatprep.subr.bf16.mxu0 0
    %1507 = vmatpush1.bf16.msra.mxu0 0
    %1508 = vmatprep.mubr.bf16.mxu0 0
    %1509 = vmatmul.mubr.bf16.gmra.mrb[0].mxu0 %v1474
    %v1510 = vpop.f32.mrb[0].mxu0
    %v1511 = vadd.f32 0.0, %v1510
    %v1512 = vpop.f32.mrb[0].mxu0
    %v1513 = vadd.f32 0.0, %v1512
    %v1514 = vpop.f32.mrb[0].mxu0
    %v1515 = vpop.f32.mrb[0].mxu0
    %1516 = vdwg.mxu0
    %v1517 = vadd.f32 %v1467, %v1511
    %v1518 = vadd.f32 %v1468, %v1513
    %v1519 = vtanh.pop %v1517
    %v1520 = vtanh.pop %v1518
    %v1521 = vmul.f32 %v1519, %v435
    %v1522 = vmul.f32 %v1520, %v439
    %v1523 = vadd.f32 %v1521, %v448
    %v1524 = vadd.f32 %v1522, %v452
    %v1525 = vmul.f32 %v1523, %v1464
    %v1526 = vmul.f32 %v1523, %v1524
    %1528 = vrot.lane.b32.xlu0 %v1526, 64
    %v1529 = vpop.permute.xlu0 %1528
    %v1531 = vadd.f32 %v1525, %v1529
    %v1532 = vtanh.pop %v1531
    %v1533 = vmul.f32 %v1524, %v1532
    %v1534 = vld [vmem:[#allocation4 + $0x40] sm:$0xff]
    %v1535 = vld [vmem:[#allocation4 + $0x48] sm:$0xff]
    %v1536 = vpack.c.bf16 %v1533, %v1533
    %1538 = vrot.lane.b32.xlu0 %v1536, 64
    %v1539 = vpop.permute.xlu0 %1538
    %v1541 = vsel %vm378, %v1539, 0
    %1543 = vmatprep.subr.bf16.mxu0 %v1392
    %1544 = vmatpush1.bf16.msra.mxu0 %v1391
    %1545 = vmatprep.subr.bf16.mxu0 %v1394
    %1546 = vmatpush1.bf16.msra.mxu0 %v1393
    %1547 = vmatprep.subr.bf16.mxu0 %v1396
    %1548 = vmatpush1.bf16.msra.mxu0 %v1395
    %1549 = vmatprep.subr.bf16.mxu0 %v1398
    %1550 = vmatpush1.bf16.msra.mxu0 %v1397
    %1551 = vmatprep.subr.bf16.mxu0 0
    %1552 = vmatpush1.bf16.msra.mxu0 0
    %1553 = vmatprep.subr.bf16.mxu0 0
    %1554 = vmatpush1.bf16.msra.mxu0 0
    %1555 = vmatprep.subr.bf16.mxu0 0
    %1556 = vmatpush1.bf16.msra.mxu0 0
    %1557 = vmatprep.subr.bf16.mxu0 0
    %1558 = vmatpush1.bf16.msra.mxu0 0
    %1559 = vmatprep.subr.bf16.mxu0 0
    %1560 = vmatpush1.bf16.msra.mxu0 0
    %1561 = vmatprep.subr.bf16.mxu0 0
    %1562 = vmatpush1.bf16.msra.mxu0 0
    %1563 = vmatprep.subr.bf16.mxu0 0
    %1564 = vmatpush1.bf16.msra.mxu0 0
    %1565 = vmatprep.subr.bf16.mxu0 0
    %1566 = vmatpush1.bf16.msra.mxu0 0
    %1567 = vmatprep.subr.bf16.mxu0 0
    %1568 = vmatpush1.bf16.msra.mxu0 0
    %1569 = vmatprep.subr.bf16.mxu0 0
    %1570 = vmatpush1.bf16.msra.mxu0 0
    %1571 = vmatprep.subr.bf16.mxu0 0
    %1572 = vmatpush1.bf16.msra.mxu0 0
    %1573 = vmatprep.subr.bf16.mxu0 0
    %1574 = vmatpush1.bf16.msra.mxu0 0
    %1575 = vmatprep.mubr.bf16.mxu0 0
    %1576 = vmatmul.mubr.bf16.gmra.mrb[0].mxu0 %v1541
    %v1577 = vpop.f32.mrb[0].mxu0
    %v1578 = vadd.f32 0.0, %v1577
    %v1579 = vpop.f32.mrb[0].mxu0
    %v1580 = vadd.f32 0.0, %v1579
    %v1581 = vpop.f32.mrb[0].mxu0
    %v1582 = vpop.f32.mrb[0].mxu0
    %1583 = vdwg.mxu0
    %v1584 = vadd.f32 %v1534, %v1578
    %v1585 = vadd.f32 %v1535, %v1580
    %v1586 = vtanh.pop %v1584
    %v1587 = vtanh.pop %v1585
    %v1588 = vmul.f32 %v1586, %v435
    %v1589 = vmul.f32 %v1587, %v439
    %v1590 = vadd.f32 %v1588, %v448
    %v1591 = vadd.f32 %v1589, %v452
    %v1592 = vmul.f32 %v1590, %v1531
    %v1593 = vmul.f32 %v1590, %v1591
    %1595 = vrot.lane.b32.xlu0 %v1593, 64
    %v1596 = vpop.permute.xlu0 %1595
    %v1598 = vadd.f32 %v1592, %v1596
    %v1599 = vtanh.pop %v1598
    %v1600 = vmul.f32 %v1591, %v1599
    %v1601 = vld [vmem:[#allocation4 + $0x60] sm:$0xff]
    %v1602 = vld [vmem:[#allocation4 + $0x68] sm:$0xff]
    %v1603 = vpack.c.bf16 %v1600, %v1600
    %1605 = vrot.lane.b32.xlu0 %v1603, 64
    %v1606 = vpop.permute.xlu0 %1605
    %v1608 = vsel %vm378, %v1606, 0
    %1610 = vmatprep.subr.bf16.mxu0 %v1392
    %1611 = vmatpush1.bf16.msra.mxu0 %v1391
    %1612 = vmatprep.subr.bf16.mxu0 %v1394
    %1613 = vmatpush1.bf16.msra.mxu0 %v1393
    %1614 = vmatprep.subr.bf16.mxu0 %v1396
    %1615 = vmatpush1.bf16.msra.mxu0 %v1395
    %1616 = vmatprep.subr.bf16.mxu0 %v1398
    %1617 = vmatpush1.bf16.msra.mxu0 %v1397
    %1618 = vmatprep.subr.bf16.mxu0 0
    %1619 = vmatpush1.bf16.msra.mxu0 0
    %1620 = vmatprep.subr.bf16.mxu0 0
    %1621 = vmatpush1.bf16.msra.mxu0 0
    %1622 = vmatprep.subr.bf16.mxu0 0
    %1623 = vmatpush1.bf16.msra.mxu0 0
    %1624 = vmatprep.subr.bf16.mxu0 0
    %1625 = vmatpush1.bf16.msra.mxu0 0
    %1626 = vmatprep.subr.bf16.mxu0 0
    %1627 = vmatpush1.bf16.msra.mxu0 0
    %1628 = vmatprep.subr.bf16.mxu0 0
    %1629 = vmatpush1.bf16.msra.mxu0 0
    %1630 = vmatprep.subr.bf16.mxu0 0
    %1631 = vmatpush1.bf16.msra.mxu0 0
    %1632 = vmatprep.subr.bf16.mxu0 0
    %1633 = vmatpush1.bf16.msra.mxu0 0
    %1634 = vmatprep.subr.bf16.mxu0 0
    %1635 = vmatpush1.bf16.msra.mxu0 0
    %1636 = vmatprep.subr.bf16.mxu0 0
    %1637 = vmatpush1.bf16.msra.mxu0 0
    %1638 = vmatprep.subr.bf16.mxu0 0
    %1639 = vmatpush1.bf16.msra.mxu0 0
    %1640 = vmatprep.subr.bf16.mxu0 0
    %1641 = vmatpush1.bf16.msra.mxu0 0
    %1642 = vmatprep.mubr.bf16.mxu0 0
    %1643 = vmatmul.mubr.bf16.gmra.mrb[0].mxu0 %v1608
    %v1644 = vpop.f32.mrb[0].mxu0
    %v1645 = vadd.f32 0.0, %v1644
    %v1646 = vpop.f32.mrb[0].mxu0
    %v1647 = vadd.f32 0.0, %v1646
    %v1648 = vpop.f32.mrb[0].mxu0
    %v1649 = vpop.f32.mrb[0].mxu0
    %1650 = vdwg.mxu0
    %v1651 = vadd.f32 %v1601, %v1645
    %v1652 = vadd.f32 %v1602, %v1647
    %v1653 = vtanh.pop %v1651
    %v1654 = vtanh.pop %v1652
    %v1655 = vmul.f32 %v1653, %v435
    %v1656 = vmul.f32 %v1654, %v439
    %v1657 = vadd.f32 %v1655, %v448
    %v1658 = vadd.f32 %v1656, %v452
    %v1659 = vmul.f32 %v1657, %v1598
    %v1660 = vmul.f32 %v1657, %v1658
    %1662 = vrot.lane.b32.xlu0 %v1660, 64
    %v1663 = vpop.permute.xlu0 %1662
    %v1665 = vadd.f32 %v1659, %v1663
    %v1666 = vtanh.pop %v1665
    %v1667 = vmul.f32 %v1658, %v1666
    %v1668 = vld [vmem:[#allocation4 + $0x80] sm:$0xff]
    %v1669 = vld [vmem:[#allocation4 + $0x88] sm:$0xff]
    %v1670 = vpack.c.bf16 %v1667, %v1667
    %1672 = vrot.lane.b32.xlu0 %v1670, 64
    %v1673 = vpop.permute.xlu0 %1672
    %v1675 = vsel %vm378, %v1673, 0
    %1677 = vmatprep.subr.bf16.mxu0 %v1392
    %1678 = vmatpush1.bf16.msra.mxu0 %v1391
    %1679 = vmatprep.subr.bf16.mxu0 %v1394
    %1680 = vmatpush1.bf16.msra.mxu0 %v1393
    %1681 = vmatprep.subr.bf16.mxu0 %v1396
    %1682 = vmatpush1.bf16.msra.mxu0 %v1395
    %1683 = vmatprep.subr.bf16.mxu0 %v1398
    %1684 = vmatpush1.bf16.msra.mxu0 %v1397
    %1685 = vmatprep.subr.bf16.mxu0 0
    %1686 = vmatpush1.bf16.msra.mxu0 0
    %1687 = vmatprep.subr.bf16.mxu0 0
    %1688 = vmatpush1.bf16.msra.mxu0 0
    %1689 = vmatprep.subr.bf16.mxu0 0
    %1690 = vmatpush1.bf16.msra.mxu0 0
    %1691 = vmatprep.subr.bf16.mxu0 0
    %1692 = vmatpush1.bf16.msra.mxu0 0
    %1693 = vmatprep.subr.bf16.mxu0 0
    %1694 = vmatpush1.bf16.msra.mxu0 0
    %1695 = vmatprep.subr.bf16.mxu0 0
    %1696 = vmatpush1.bf16.msra.mxu0 0
    %1697 = vmatprep.subr.bf16.mxu0 0
    %1698 = vmatpush1.bf16.msra.mxu0 0
    %1699 = vmatprep.subr.bf16.mxu0 0
    %1700 = vmatpush1.bf16.msra.mxu0 0
    %1701 = vmatprep.subr.bf16.mxu0 0
    %1702 = vmatpush1.bf16.msra.mxu0 0
    %1703 = vmatprep.subr.bf16.mxu0 0
    %1704 = vmatpush1.bf16.msra.mxu0 0
    %1705 = vmatprep.subr.bf16.mxu0 0
    %1706 = vmatpush1.bf16.msra.mxu0 0
    %1707 = vmatprep.subr.bf16.mxu0 0
    %1708 = vmatpush1.bf16.msra.mxu0 0
    %1709 = vmatprep.mubr.bf16.mxu0 0
    %1710 = vmatmul.mubr.bf16.gmra.mrb[0].mxu0 %v1675
    %v1711 = vpop.f32.mrb[0].mxu0
    %v1712 = vadd.f32 0.0, %v1711
    %v1713 = vpop.f32.mrb[0].mxu0
    %v1714 = vadd.f32 0.0, %v1713
    %v1715 = vpop.f32.mrb[0].mxu0
    %v1716 = vpop.f32.mrb[0].mxu0
    %1717 = vdwg.mxu0
    %v1718 = vadd.f32 %v1668, %v1712
    %v1719 = vadd.f32 %v1669, %v1714
    %v1720 = vtanh.pop %v1718
    %v1721 = vtanh.pop %v1719
    %v1722 = vmul.f32 %v1720, %v435
    %v1723 = vmul.f32 %v1721, %v439
    %v1724 = vadd.f32 %v1722, %v448
    %v1725 = vadd.f32 %v1723, %v452
    %v1726 = vmul.f32 %v1724, %v1665
    %v1727 = vmul.f32 %v1724, %v1725
    %1729 = vrot.lane.b32.xlu0 %v1727, 64
    %v1730 = vpop.permute.xlu0 %1729
    %v1732 = vadd.f32 %v1726, %v1730
    %v1733 = vtanh.pop %v1732
    %v1734 = vmul.f32 %v1725, %v1733
    %v1735 = vld [vmem:[#allocation4 + $0xa0] sm:$0xff]
    %v1736 = vld [vmem:[#allocation4 + $0xa8] sm:$0xff]
    %v1737 = vpack.c.bf16 %v1734, %v1734
    %1739 = vrot.lane.b32.xlu0 %v1737, 64
    %v1740 = vpop.permute.xlu0 %1739
    %v1742 = vsel %vm378, %v1740, 0
    %1744 = vmatprep.subr.bf16.mxu0 %v1392
    %1745 = vmatpush1.bf16.msra.mxu0 %v1391
    %1746 = vmatprep.subr.bf16.mxu0 %v1394
    %1747 = vmatpush1.bf16.msra.mxu0 %v1393
    %1748 = vmatprep.subr.bf16.mxu0 %v1396
    %1749 = vmatpush1.bf16.msra.mxu0 %v1395
    %1750 = vmatprep.subr.bf16.mxu0 %v1398
    %1751 = vmatpush1.bf16.msra.mxu0 %v1397
    %1752 = vmatprep.subr.bf16.mxu0 0
    %1753 = vmatpush1.bf16.msra.mxu0 0
    %1754 = vmatprep.subr.bf16.mxu0 0
    %1755 = vmatpush1.bf16.msra.mxu0 0
    %1756 = vmatprep.subr.bf16.mxu0 0
    %1757 = vmatpush1.bf16.msra.mxu0 0
    %1758 = vmatprep.subr.bf16.mxu0 0
    %1759 = vmatpush1.bf16.msra.mxu0 0
    %1760 = vmatprep.subr.bf16.mxu0 0
    %1761 = vmatpush1.bf16.msra.mxu0 0
    %1762 = vmatprep.subr.bf16.mxu0 0
    %1763 = vmatpush1.bf16.msra.mxu0 0
    %1764 = vmatprep.subr.bf16.mxu0 0
    %1765 = vmatpush1.bf16.msra.mxu0 0
    %1766 = vmatprep.subr.bf16.mxu0 0
    %1767 = vmatpush1.bf16.msra.mxu0 0
    %1768 = vmatprep.subr.bf16.mxu0 0
    %1769 = vmatpush1.bf16.msra.mxu0 0
    %1770 = vmatprep.subr.bf16.mxu0 0
    %1771 = vmatpush1.bf16.msra.mxu0 0
    %1772 = vmatprep.subr.bf16.mxu0 0
    %1773 = vmatpush1.bf16.msra.mxu0 0
    %1774 = vmatprep.subr.bf16.mxu0 0
    %1775 = vmatpush1.bf16.msra.mxu0 0
    %1776 = vmatprep.mubr.bf16.mxu0 0
    %1777 = vmatmul.mubr.bf16.gmra.mrb[0].mxu0 %v1742
    %v1778 = vpop.f32.mrb[0].mxu0
    %v1779 = vadd.f32 0.0, %v1778
    %v1780 = vpop.f32.mrb[0].mxu0
    %v1781 = vadd.f32 0.0, %v1780
    %v1782 = vpop.f32.mrb[0].mxu0
    %v1783 = vpop.f32.mrb[0].mxu0
    %1784 = vdwg.mxu0
    %v1785 = vadd.f32 %v1735, %v1779
    %v1786 = vadd.f32 %v1736, %v1781
    %v1787 = vtanh.pop %v1785
    %v1788 = vtanh.pop %v1786
    %v1789 = vmul.f32 %v1787, %v435
    %v1790 = vmul.f32 %v1788, %v439
    %v1791 = vadd.f32 %v1789, %v448
    %v1792 = vadd.f32 %v1790, %v452
    %v1793 = vmul.f32 %v1791, %v1732
    %v1794 = vmul.f32 %v1791, %v1792
    %1796 = vrot.lane.b32.xlu0 %v1794, 64
    %v1797 = vpop.permute.xlu0 %1796
    %v1799 = vadd.f32 %v1793, %v1797
    %v1800 = vtanh.pop %v1799
    %v1801 = vmul.f32 %v1792, %v1800
    %v1802 = vld [vmem:[#allocation4 + $0xc0] sm:$0xff]
    %v1803 = vld [vmem:[#allocation4 + $0xc8] sm:$0xff]
    %v1804 = vpack.c.bf16 %v1801, %v1801
    %1806 = vrot.lane.b32.xlu0 %v1804, 64
    %v1807 = vpop.permute.xlu0 %1806
    %v1809 = vsel %vm378, %v1807, 0
    %1811 = vmatprep.subr.bf16.mxu0 %v1392
    %1812 = vmatpush1.bf16.msra.mxu0 %v1391
    %1813 = vmatprep.subr.bf16.mxu0 %v1394
    %1814 = vmatpush1.bf16.msra.mxu0 %v1393
    %1815 = vmatprep.subr.bf16.mxu0 %v1396
    %1816 = vmatpush1.bf16.msra.mxu0 %v1395
    %1817 = vmatprep.subr.bf16.mxu0 %v1398
    %1818 = vmatpush1.bf16.msra.mxu0 %v1397
    %1819 = vmatprep.subr.bf16.mxu0 0
    %1820 = vmatpush1.bf16.msra.mxu0 0
    %1821 = vmatprep.subr.bf16.mxu0 0
    %1822 = vmatpush1.bf16.msra.mxu0 0
    %1823 = vmatprep.subr.bf16.mxu0 0
    %1824 = vmatpush1.bf16.msra.mxu0 0
    %1825 = vmatprep.subr.bf16.mxu0 0
    %1826 = vmatpush1.bf16.msra.mxu0 0
    %1827 = vmatprep.subr.bf16.mxu0 0
    %1828 = vmatpush1.bf16.msra.mxu0 0
    %1829 = vmatprep.subr.bf16.mxu0 0
    %1830 = vmatpush1.bf16.msra.mxu0 0
    %1831 = vmatprep.subr.bf16.mxu0 0
    %1832 = vmatpush1.bf16.msra.mxu0 0
    %1833 = vmatprep.subr.bf16.mxu0 0
    %1834 = vmatpush1.bf16.msra.mxu0 0
    %1835 = vmatprep.subr.bf16.mxu0 0
    %1836 = vmatpush1.bf16.msra.mxu0 0
    %1837 = vmatprep.subr.bf16.mxu0 0
    %1838 = vmatpush1.bf16.msra.mxu0 0
    %1839 = vmatprep.subr.bf16.mxu0 0
    %1840 = vmatpush1.bf16.msra.mxu0 0
    %1841 = vmatprep.subr.bf16.mxu0 0
    %1842 = vmatpush1.bf16.msra.mxu0 0
    %1843 = vmatprep.mubr.bf16.mxu0 0
    %1844 = vmatmul.mubr.bf16.gmra.mrb[0].mxu0 %v1809
    %v1845 = vpop.f32.mrb[0].mxu0
    %v1846 = vadd.f32 0.0, %v1845
    %v1847 = vpop.f32.mrb[0].mxu0
    %v1848 = vadd.f32 0.0, %v1847
    %v1849 = vpop.f32.mrb[0].mxu0
    %v1850 = vpop.f32.mrb[0].mxu0
    %1851 = vdwg.mxu0
    %v1852 = vadd.f32 %v1802, %v1846
    %v1853 = vadd.f32 %v1803, %v1848
    %v1854 = vtanh.pop %v1852
    %v1855 = vtanh.pop %v1853
    %v1856 = vmul.f32 %v1854, %v435
    %v1857 = vmul.f32 %v1855, %v439
    %v1858 = vadd.f32 %v1856, %v448
    %v1859 = vadd.f32 %v1857, %v452
    %v1860 = vmul.f32 %v1858, %v1799
    %v1861 = vmul.f32 %v1858, %v1859
    %1863 = vrot.lane.b32.xlu0 %v1861, 64
    %v1864 = vpop.permute.xlu0 %1863
    %v1866 = vadd.f32 %v1860, %v1864
    %v1867 = vtanh.pop %v1866
    %v1868 = vmul.f32 %v1859, %v1867
    %v1869 = vld [vmem:[#allocation4 + $0xe0] sm:$0xff]
    %v1870 = vld [vmem:[#allocation4 + $0xe8] sm:$0xff]
    %v1871 = vpack.c.bf16 %v1868, %v1868
    %1873 = vrot.lane.b32.xlu0 %v1871, 64
    %v1874 = vpop.permute.xlu0 %1873
    %v1876 = vsel %vm378, %v1874, 0
    %1878 = vmatprep.subr.bf16.mxu0 %v1392
    %1879 = vmatpush1.bf16.msra.mxu0 %v1391
    %1880 = vmatprep.subr.bf16.mxu0 %v1394
    %1881 = vmatpush1.bf16.msra.mxu0 %v1393
    %1882 = vmatprep.subr.bf16.mxu0 %v1396
    %1883 = vmatpush1.bf16.msra.mxu0 %v1395
    %1884 = vmatprep.subr.bf16.mxu0 %v1398
    %1885 = vmatpush1.bf16.msra.mxu0 %v1397
    %1886 = vmatprep.subr.bf16.mxu0 0
    %1887 = vmatpush1.bf16.msra.mxu0 0
    %1888 = vmatprep.subr.bf16.mxu0 0
    %1889 = vmatpush1.bf16.msra.mxu0 0
    %1890 = vmatprep.subr.bf16.mxu0 0
    %1891 = vmatpush1.bf16.msra.mxu0 0
    %1892 = vmatprep.subr.bf16.mxu0 0
    %1893 = vmatpush1.bf16.msra.mxu0 0
    %1894 = vmatprep.subr.bf16.mxu0 0
    %1895 = vmatpush1.bf16.msra.mxu0 0
    %1896 = vmatprep.subr.bf16.mxu0 0
    %1897 = vmatpush1.bf16.msra.mxu0 0
    %1898 = vmatprep.subr.bf16.mxu0 0
    %1899 = vmatpush1.bf16.msra.mxu0 0
    %1900 = vmatprep.subr.bf16.mxu0 0
    %1901 = vmatpush1.bf16.msra.mxu0 0
    %1902 = vmatprep.subr.bf16.mxu0 0
    %1903 = vmatpush1.bf16.msra.mxu0 0
    %1904 = vmatprep.subr.bf16.mxu0 0
    %1905 = vmatpush1.bf16.msra.mxu0 0
    %1906 = vmatprep.subr.bf16.mxu0 0
    %1907 = vmatpush1.bf16.msra.mxu0 0
    %1908 = vmatprep.subr.bf16.mxu0 0
    %1909 = vmatpush1.bf16.msra.mxu0 0
    %1910 = vmatprep.mubr.bf16.mxu0 0
    %1911 = vmatmul.mubr.bf16.gmra.mrb[0].mxu0 %v1876
    %v1912 = vpop.f32.mrb[0].mxu0
    %v1913 = vadd.f32 0.0, %v1912
    %v1914 = vpop.f32.mrb[0].mxu0
    %v1915 = vadd.f32 0.0, %v1914
    %v1916 = vpop.f32.mrb[0].mxu0
    %v1917 = vpop.f32.mrb[0].mxu0
    %1918 = vdwg.mxu0
    %v1919 = vadd.f32 %v1869, %v1913
    %v1920 = vadd.f32 %v1870, %v1915
    %v1921 = vtanh.pop %v1919
    %v1922 = vtanh.pop %v1920
    %v1923 = vmul.f32 %v1921, %v435
    %v1924 = vmul.f32 %v1922, %v439
    %v1925 = vadd.f32 %v1923, %v448
    %v1926 = vadd.f32 %v1924, %v452
    %v1927 = vmul.f32 %v1925, %v1866
    %v1928 = vmul.f32 %v1925, %v1926
    %1930 = vrot.lane.b32.xlu0 %v1928, 64
    %v1931 = vpop.permute.xlu0 %1930
    %v1933 = vadd.f32 %v1927, %v1931
    %v1934 = vtanh.pop %v1933
    %v1935 = vmul.f32 %v1926, %v1934
    %v1936 = vld [vmem:[%s7] sm:$0xff]
    %v1937 = vld [vmem:[%s7 + $0x8] sm:$0xff]
    %v1938 = vld [vmem:[%s7 + $0x10] sm:$0xff]
    %v1939 = vld [vmem:[%s7 + $0x18] sm:$0xff]
    %v1940 = vld [vmem:[%s7 + $0x20] sm:$0xff]
    %v1941 = vld [vmem:[%s7 + $0x28] sm:$0xff]
    %v1942 = vld [vmem:[%s7 + $0x30] sm:$0xff]
    %v1943 = vld [vmem:[%s7 + $0x38] sm:$0xff]
    %1945 = vrot.lane.b32.xlu0 %v1466, 32
    %v1946 = vpop.permute.xlu0 %1945
    %v1947 = vsel %vm470, %v1946, 0
    %1949 = vmatprep.subr.mxu0 0.0
    %1950 = vmatpush1.msra.mxu0 %v1940
    %1951 = vmatprep.subr.mxu0 0.0
    %1952 = vmatpush1.msra.mxu0 %v1941
    %1953 = vmatprep.subr.mxu0 0.0
    %1954 = vmatpush1.msra.mxu0 %v1942
    %1955 = vmatprep.subr.mxu0 0.0
    %1956 = vmatpush1.msra.mxu0 %v1943
    %1957 = vmatprep.subr.mxu0 0.0
    %1958 = vmatpush1.msra.mxu0 0.0
    %1959 = vmatprep.subr.mxu0 0.0
    %1960 = vmatpush1.msra.mxu0 0.0
    %1961 = vmatprep.subr.mxu0 0.0
    %1962 = vmatpush1.msra.mxu0 0.0
    %1963 = vmatprep.subr.mxu0 0.0
    %1964 = vmatpush1.msra.mxu0 0.0
    %1965 = vmatprep.subr.mxu0 0.0
    %1966 = vmatpush1.msra.mxu0 0.0
    %1967 = vmatprep.subr.mxu0 0.0
    %1968 = vmatpush1.msra.mxu0 0.0
    %1969 = vmatprep.subr.mxu0 0.0
    %1970 = vmatpush1.msra.mxu0 0.0
    %1971 = vmatprep.subr.mxu0 0.0
    %1972 = vmatpush1.msra.mxu0 0.0
    %1973 = vmatprep.subr.mxu0 0.0
    %1974 = vmatpush1.msra.mxu0 0.0
    %1975 = vmatprep.subr.mxu0 0.0
    %1976 = vmatpush1.msra.mxu0 0.0
    %1977 = vmatprep.subr.mxu0 0.0
    %1978 = vmatpush1.msra.mxu0 0.0
    %1979 = vmatprep.subr.mxu0 0.0
    %1980 = vmatpush1.msra.mxu0 0.0
    %1981 = vmatprep.subr.mxu0 0.0
    %1982 = vmatpush1.msra.mxu0 0.0
    %1983 = vmatprep.subr.mxu0 0.0
    %1984 = vmatpush1.msra.mxu0 0.0
    %1985 = vmatprep.subr.mxu0 0.0
    %1986 = vmatpush1.msra.mxu0 0.0
    %1987 = vmatprep.subr.mxu0 0.0
    %1988 = vmatpush1.msra.mxu0 0.0
    %1989 = vmatprep.subr.mxu0 0.0
    %1990 = vmatpush1.msra.mxu0 0.0
    %1991 = vmatprep.subr.mxu0 0.0
    %1992 = vmatpush1.msra.mxu0 0.0
    %1993 = vmatprep.subr.mxu0 0.0
    %1994 = vmatpush1.msra.mxu0 0.0
    %1995 = vmatprep.subr.mxu0 0.0
    %1996 = vmatpush1.msra.mxu0 0.0
    %1997 = vmatprep.subr.mxu0 0.0
    %1998 = vmatpush1.msra.mxu0 0.0
    %1999 = vmatprep.subr.mxu0 0.0
    %2000 = vmatpush1.msra.mxu0 0.0
    %2001 = vmatprep.subr.mxu0 0.0
    %2002 = vmatpush1.msra.mxu0 0.0
    %2003 = vmatprep.subr.mxu0 0.0
    %2004 = vmatpush1.msra.mxu0 0.0
    %2005 = vmatprep.subr.mxu0 0.0
    %2006 = vmatpush1.msra.mxu0 0.0
    %2007 = vmatprep.subr.mxu0 0.0
    %2008 = vmatpush1.msra.mxu0 0.0
    %2009 = vmatprep.subr.mxu0 0.0
    %2010 = vmatpush1.msra.mxu0 0.0
    %2011 = vmatprep.subr.mxu0 0.0
    %2012 = vmatpush1.msra.mxu0 0.0
    %2013 = vmatprep.mubr.f32.mxu0 0.0
    %2014 = vmatmul.mubr.f32.gmra.mrb[0].mxu0 %v1947
    %v2015 = vpop.f32.mrb[0].mxu0
    %v2016 = vadd.f32 0.0, %v2015
    %v2017 = vpop.f32.mrb[0].mxu0
    %2018 = vdwg.mxu0
    %2020 = vrot.lane.b32.xlu0 %v1935, 64
    %v2021 = vpop.permute.xlu0 %2020
    %v2022 = vsel %vm470, %v2021, 0
    %2024 = vmatprep.subr.mxu0 0.0
    %2025 = vmatpush1.msra.mxu0 %v1936
    %2026 = vmatprep.subr.mxu0 0.0
    %2027 = vmatpush1.msra.mxu0 %v1937
    %2028 = vmatprep.subr.mxu0 0.0
    %2029 = vmatpush1.msra.mxu0 %v1938
    %2030 = vmatprep.subr.mxu0 0.0
    %2031 = vmatpush1.msra.mxu0 %v1939
    %2032 = vmatprep.subr.mxu0 0.0
    %2033 = vmatpush1.msra.mxu0 0.0
    %2034 = vmatprep.subr.mxu0 0.0
    %2035 = vmatpush1.msra.mxu0 0.0
    %2036 = vmatprep.subr.mxu0 0.0
    %2037 = vmatpush1.msra.mxu0 0.0
    %2038 = vmatprep.subr.mxu0 0.0
    %2039 = vmatpush1.msra.mxu0 0.0
    %2040 = vmatprep.subr.mxu0 0.0
    %2041 = vmatpush1.msra.mxu0 0.0
    %2042 = vmatprep.subr.mxu0 0.0
    %2043 = vmatpush1.msra.mxu0 0.0
    %2044 = vmatprep.subr.mxu0 0.0
    %2045 = vmatpush1.msra.mxu0 0.0
    %2046 = vmatprep.subr.mxu0 0.0
    %2047 = vmatpush1.msra.mxu0 0.0
    %2048 = vmatprep.subr.mxu0 0.0
    %2049 = vmatpush1.msra.mxu0 0.0
    %2050 = vmatprep.subr.mxu0 0.0
    %2051 = vmatpush1.msra.mxu0 0.0
    %2052 = vmatprep.subr.mxu0 0.0
    %2053 = vmatpush1.msra.mxu0 0.0
    %2054 = vmatprep.subr.mxu0 0.0
    %2055 = vmatpush1.msra.mxu0 0.0
    %2056 = vmatprep.subr.mxu0 0.0
    %2057 = vmatpush1.msra.mxu0 0.0
    %2058 = vmatprep.subr.mxu0 0.0
    %2059 = vmatpush1.msra.mxu0 0.0
    %2060 = vmatprep.subr.mxu0 0.0
    %2061 = vmatpush1.msra.mxu0 0.0
    %2062 = vmatprep.subr.mxu0 0.0
    %2063 = vmatpush1.msra.mxu0 0.0
    %2064 = vmatprep.subr.mxu0 0.0
    %2065 = vmatpush1.msra.mxu0 0.0
    %2066 = vmatprep.subr.mxu0 0.0
    %2067 = vmatpush1.msra.mxu0 0.0
    %2068 = vmatprep.subr.mxu0 0.0
    %2069 = vmatpush1.msra.mxu0 0.0
    %2070 = vmatprep.subr.mxu0 0.0
    %2071 = vmatpush1.msra.mxu0 0.0
    %2072 = vmatprep.subr.mxu0 0.0
    %2073 = vmatpush1.msra.mxu0 0.0
    %2074 = vmatprep.subr.mxu0 0.0
    %2075 = vmatpush1.msra.mxu0 0.0
    %2076 = vmatprep.subr.mxu0 0.0
    %2077 = vmatpush1.msra.mxu0 0.0
    %2078 = vmatprep.subr.mxu0 0.0
    %2079 = vmatpush1.msra.mxu0 0.0
    %2080 = vmatprep.subr.mxu0 0.0
    %2081 = vmatpush1.msra.mxu0 0.0
    %2082 = vmatprep.subr.mxu0 0.0
    %2083 = vmatpush1.msra.mxu0 0.0
    %2084 = vmatprep.subr.mxu0 0.0
    %2085 = vmatpush1.msra.mxu0 0.0
    %2086 = vmatprep.subr.mxu0 0.0
    %2087 = vmatpush1.msra.mxu0 0.0
    %2088 = vmatprep.mubr.f32.mxu0 0.0
    %2089 = vmatmul.mubr.f32.gmra.mrb[0].mxu0 %v2022
    %v2090 = vpop.f32.mrb[0].mxu0
    %v2091 = vadd.f32 %v2016, %v2090
    %v2092 = vpop.f32.mrb[0].mxu0
    %2093 = vdwg.mxu0
    %v2094 = vld [vmem:[%s8] sm:$0x1]
    %v2096 = vlaneseq
    %v2097 = vshrl.u32 %v2096, 7
    %v2098 = vsub.s32 0, %v2097
    %v2099 = vrot.slane %v2094, %v2098
    %v2101 = vadd.f32 %v2091, %v2099
    %vm2102 = vcmask 27648
    %2103 = vst.msk [vmem:[#allocation8] sm:$0xf] %vm2102, %v2101
    // Predicated region
    $region50: #{bidirectional_lstm_forward.1} parent=1 // pred_check
      _
    $region51: #{bidirectional_lstm_forward.1} parent=1 // pred_check_branch
      %2105 = sbr.rel (0) target = $region53
    $region52: #{bidirectional_lstm_forward.1} parent=1 // pred_region
      %s2107 = ssub.s32 64, 64
      %2108 = vsyncadd [#allocation7], %s2107
      %s2110 = sshll.u32 [#allocation8], 4
      %s2111 = int_to_ptr.vmem [resolvable:$true] %s2110
      %2113 = dma.vmem_to_hbm [thread:$0]  %s2111, 64, %s11, [#allocation7]
    $region53: #{bidirectional_lstm_forward.1} parent=1 // pred_fallthru
      _
    // Predicated region
    $region54: #{bidirectional_lstm_forward.1} parent=1 // pred_check
      _
    $region55: #{bidirectional_lstm_forward.1} parent=1 // pred_check_branch
      %2115 = sbr.rel (0) target = $region57
    $region56: #{bidirectional_lstm_forward.1} parent=1 // pred_region
      %2116 = dma.done [#allocation7], 64
    $region57: #{bidirectional_lstm_forward.1} parent=1 // pred_fallthru
      _
    %2117 = vsyncpa [#allocation6], 1
    %2118 = vsyncpa [#allocation7], 1

</llo_original>
